<compile_context>
chip_gen: v7x
topology: tpu7x:2x2x1
jax: 0.10.0
libtpu: 0.0.40
codegen_flags: <defaults>
</compile_context>

<pallas_src>
import functools

import jax
import jax.numpy as jnp
from jax.experimental import pallas as pl
from jax.experimental.pallas import tpu as pltpu

_LANE = 128
_SUBLANE = 8
# Conservative per-step VMEM budget: inside v5e/v6e scoped-VMEM comfort zones
# and well under half of v7x's 64 MiB per-TensorCore VMEM.
_VMEM_BUDGET = 24 * 2**20


def _round_up(v, m):
    return -(-v // m) * m


def _padded_bytes(shape, itemsize=4):
    """VMEM bytes of an f32 tile after (8, 128) sublane/lane padding."""
    if len(shape) < 2:
        return _round_up(int(shape[0]) if shape else 1, _LANE) * itemsize
    lead = 1
    for d in shape[:-2]:
        lead *= int(d)
    return (lead * _round_up(int(shape[-2]), _SUBLANE)
            * _round_up(int(shape[-1]), _LANE) * itemsize)


def _vmem_footprint(tb, n_nodes, c_inp, c_encp, j_p, noise_c, c_out):
    """Padding-aware VMEM estimate: 2x double-buffered I/O + resident weights
    + live in-kernel temporaries."""
    io = (_padded_bytes((n_nodes * c_inp, tb))          # x slab
          + _padded_bytes((n_nodes, noise_c, tb))       # [eps | u] slab
          + _padded_bytes((n_nodes, c_out, tb)))        # packed output slab
    wgt = (_padded_bytes((n_nodes * c_encp, n_nodes * c_inp))
           + _padded_bytes((n_nodes * c_inp, n_nodes * j_p))
           + _padded_bytes((n_nodes, c_encp, 1))
           + _padded_bytes((n_nodes, c_inp, 1)))
    tmp = (n_nodes * (c_encp + 3 * j_p + c_inp + 4 * _SUBLANE)
           * _round_up(tb, _LANE) * 4)
    return 2 * (io + wgt) + tmp + (1 << 20)


def _pick_batch_tile(batch, block_b, dims):
    """Largest lane-multiple batch tile <= block_b that fits the VMEM budget.
    For very large B keep block_b modest so n_blocks >= 2 (v7x megacore)."""
    tb = max(_LANE, _round_up(min(int(block_b), max(batch, 1)), _LANE))
    tb = min(tb, _round_up(batch, _LANE))
    while tb > _LANE and _vmem_footprint(tb, *dims) > _VMEM_BUDGET:
        tb -= _LANE
    return tb


def _reduce0(x3, binop):
    """Reduce over the leading (node) axis with keepdims, unrolled into plain
    elementwise VPU ops: stays lane-dense and needs no XLU / relayout."""
    acc = x3[0]
    for i in range(1, x3.shape[0]):
        acc = binop(acc, x3[i])
    return acc[None, :, :]


# ----------------------------------------------------------------------------
# Fused kernel: encoder matmul -> Gumbel-softmax (node dim) -> Gaussian
# reparameterization -> decoder matmul -> softmax(log_pis) (node dim)
# ----------------------------------------------------------------------------
def _fused_vae_kernel(x_ref, noise_ref, wenc_ref, benc_ref, wdec_ref, bdec_ref,
                      out_ref, *, n_gum, n_lat, gum_p, lat_p, c_in, c_inp,
                      c_encp, j_p, inv_temp):
    n_nodes = out_ref.shape[0]
    tb = out_ref.shape[-1]
    f32 = jnp.float32
    tiny = 1e-20

    # ---- encoder: ONE block-diagonal matmul; MXU N-dim = lane-dense batch tile.
    enc2d = jnp.dot(wenc_ref[...], x_ref[...], preferred_element_type=f32)
    # (N*C_encp, TB) -> (N, C_encp, TB): 8-aligned row regrouping, minor dim kept.
    enc = enc2d.reshape(n_nodes, c_encp, tb) + benc_ref[...]

    log_pis = enc[:, :n_gum, :]
    log_var = enc[:, gum_p:gum_p + n_lat, :]
    z_mu = enc[:, gum_p + lat_p:gum_p + lat_p + n_lat, :]

    # ---- Gumbel-softmax sample over the node dim (leading axis -> pure VPU).
    u = noise_ref[:, n_lat:n_lat + n_gum, :]
    gumbel = -jnp.log(-jnp.log(u + tiny) + tiny)
    y = (log_pis + gumbel) * inv_temp
    y = y - _reduce0(y, jnp.maximum)
    ey = jnp.exp(y)
    x_gbl = ey / _reduce0(ey, jnp.add)

    # ---- Gaussian reparameterization: eps * exp(log_var / 2) + z_mu
    eps = noise_ref[:, :n_lat, :]
    x_gauss = eps * jnp.exp(log_var * 0.5) + z_mu

    # ---- decoder: ONE block-diagonal matmul on concat([x_gbl, x_gauss], ch).
    parts = [x_gbl]
    if gum_p > n_gum:
        parts.append(jnp.zeros((n_nodes, gum_p - n_gum, tb), f32))
    parts.append(x_gauss)
    if lat_p > n_lat:
        parts.append(jnp.zeros((n_nodes, lat_p - n_lat, tb), f32))
    xs = jnp.concatenate(parts, axis=1)                       # (N, Jp, TB)
    dec2d = jnp.dot(wdec_ref[...], xs.reshape(n_nodes * j_p, tb),
                    preferred_element_type=f32)
    pred = dec2d.reshape(n_nodes, c_inp, tb) + bdec_ref[...]

    # ---- softmax(log_pis) over the node dim; exact divide for the
    #      user-visible output (may feed a KL/ELBO term).
    sp = jnp.exp(log_pis - _reduce0(log_pis, jnp.maximum))
    pis = sp / _reduce0(sp, jnp.add)

    # ---- single packed, lane-dense output slab: [pred | z_mu | log_var | pis]
    od = out_ref.dtype
    out_ref[:, :c_in, :] = pred[:, :c_in, :].astype(od)
    out_ref[:, c_in:c_in + n_lat, :] = z_mu.astype(od)
    out_ref[:, c_in + n_lat:c_in + 2 * n_lat, :] = log_var.astype(od)
    out_ref[:, c_in + 2 * n_lat:, :] = pis.astype(od)


# ----------------------------------------------------------------------------
# SnBoolVAE forward
# ----------------------------------------------------------------------------
def sn_bool_vae_forward(x, params, *, num_gumbel, temperature, rng_key=None,
                        noise=None, block_b=1024):
    """x: (B, N, C_in) float32.  Returns (predict, z_mu, log_var, pis),
    each (B, N, .) like the PyTorch module."""
    B, n_nodes, c_in = x.shape
    w_enc, b_enc = params["w_enc"], params["b_enc"]
    w_dec, b_dec = params["w_dec"], params["b_dec"]
    c_enc = w_enc.shape[1]
    n_gum = int(num_gumbel)
    assert (c_enc - n_gum) % 2 == 0, "Number of channels is not even!"
    n_lat = (c_enc - n_gum) // 2

    # sublane-aligned channel groups inside the padded encoder output
    gum_p = _round_up(n_gum, _SUBLANE)
    lat_p = _round_up(n_lat, _SUBLANE)
    c_inp = _round_up(c_in, _SUBLANE)
    c_encp = gum_p + 2 * lat_p          # [pis | pad | log_var | z_mu]
    j_p = gum_p + lat_p                 # decoder input [x_gbl | pad | x_gauss]
    noise_c = n_lat + n_gum             # [eps | u]  (both slices 8-aligned)
    c_out = c_in + 2 * n_lat + n_gum    # packed output slab channels

    dims = (n_nodes, c_inp, c_encp, j_p, noise_c, c_out)
    tb = _pick_batch_tile(B, block_b, dims)
    n_blocks = -(-B // tb)
    b_pad = n_blocks * tb
    dtype = x.dtype

    # ---- layout plumbing (XLA): channels -> rows/sublanes, batch -> lanes.
    # Transpose and tail-pad fuse into a single rewrite of x.
    x2d = (jnp.zeros((n_nodes, c_inp, b_pad), dtype)
           .at[:, :c_in, :B].set(jnp.transpose(x, (1, 2, 0)))
           .reshape(n_nodes * c_inp, b_pad))

    if noise is None:
        assert rng_key is not None, "need rng_key or explicit noise"
        k_e, k_u = jax.random.split(rng_key)
        eps_t = jax.random.normal(k_e, (n_nodes, n_lat, b_pad), dtype)
        u_t = jax.random.uniform(k_u, (n_nodes, n_gum, b_pad), dtype)
    else:
        u_bng, eps_bnl = noise          # (B, N, G), (B, N, L) like torch
        eps_t = (jnp.zeros((n_nodes, n_lat, b_pad), dtype)
                 .at[:, :, :B].set(jnp.transpose(eps_bnl, (1, 2, 0))))
        u_t = (jnp.zeros((n_nodes, n_gum, b_pad), dtype)
               .at[:, :, :B].set(jnp.transpose(u_bng, (1, 2, 0))))
    noise_t = jnp.concatenate([eps_t, u_t], axis=1)   # (N, L+G, b_pad)

    # ---- block-diagonal Sn-equivariant weights (same per-node linear for all
    #      nodes); zero rows/cols implement the sublane padding.  Small N only:
    #      the block weight is N^2 * C_enc * C_in floats.
    we = jnp.zeros((c_encp, c_inp), dtype)
    we = we.at[:n_gum, :c_in].set(w_enc[:, :n_gum].T)
    we = we.at[gum_p:gum_p + n_lat, :c_in].set(w_enc[:, n_gum:n_gum + n_lat].T)
    we = we.at[gum_p + lat_p:gum_p + lat_p + n_lat, :c_in].set(
        w_enc[:, n_gum + n_lat:].T)
    w_enc_blk = jnp.kron(jnp.eye(n_nodes, dtype=dtype), we)   # (N*C_encp, N*C_inp)

    wd = jnp.zeros((c_inp, j_p), dtype)
    wd = wd.at[:c_in, :n_gum].set(w_dec[:n_gum, :].T)
    wd = wd.at[:c_in, gum_p:gum_p + n_lat].set(w_dec[n_gum:, :].T)
    w_dec_blk = jnp.kron(jnp.eye(n_nodes, dtype=dtype), wd)   # (N*C_inp, N*Jp)

    be = jnp.zeros((c_encp,), dtype)
    be = be.at[:n_gum].set(b_enc[0, :n_gum])
    be = be.at[gum_p:gum_p + n_lat].set(b_enc[0, n_gum:n_gum + n_lat])
    be = be.at[gum_p + lat_p:gum_p + lat_p + n_lat].set(b_enc[0, n_gum + n_lat:])
    b_enc_t = jnp.tile(be[None, :, None], (n_nodes, 1, 1))    # (N, C_encp, 1)
    bd = jnp.zeros((c_inp,), dtype).at[:c_in].set(b_dec[0])
    b_dec_t = jnp.tile(bd[None, :, None], (n_nodes, 1, 1))    # (N, C_inp, 1)

    kernel = functools.partial(
        _fused_vae_kernel, n_gum=n_gum, n_lat=n_lat, gum_p=gum_p, lat_p=lat_p,
        c_in=c_in, c_inp=c_inp, c_encp=c_encp, j_p=j_p,
        inv_temp=1.0 / float(temperature))

    bmap2 = lambda i: (0, i)
    bmap3 = lambda i: (0, 0, i)
    wmap2 = lambda i: (0, 0)       # resident weights: same block every step
    wmap3 = lambda i: (0, 0, 0)

    grid_spec = pltpu.PrefetchScalarGridSpec(
        num_scalar_prefetch=0,
        grid=(n_blocks,),
        in_specs=[
            pl.BlockSpec((n_nodes * c_inp, tb), bmap2),             # x slab
            pl.BlockSpec((n_nodes, noise_c, tb), bmap3),            # [eps | u]
            pl.BlockSpec((n_nodes * c_encp, n_nodes * c_inp), wmap2),
            pl.BlockSpec((n_nodes, c_encp, 1), wmap3),
            pl.BlockSpec((n_nodes * c_inp, n_nodes * j_p), wmap2),
            pl.BlockSpec((n_nodes, c_inp, 1), wmap3),
        ],
        out_specs=pl.BlockSpec((n_nodes, c_out, tb), bmap3),
    )
    vmem_limit = int(_vmem_footprint(tb, *dims) + (2 << 20))

    out = pl.pallas_call(
        kernel,
        out_shape=jax.ShapeDtypeStruct((n_nodes, c_out, b_pad), dtype),
        grid_spec=grid_spec,
        compiler_params=pltpu.CompilerParams(
            dimension_semantics=("parallel",),
            vmem_limit_bytes=vmem_limit),
    )(x2d, noise_t, w_enc_blk, b_enc_t, w_dec_blk, b_dec_t)

    # ---- split the packed slab and transpose back to (B, N, C) layout.
    predict = jnp.transpose(out[:, :c_in, :B], (2, 0, 1))
    z_mu = jnp.transpose(out[:, c_in:c_in + n_lat, :B], (2, 0, 1))
    log_var = jnp.transpose(out[:, c_in + n_lat:c_in + 2 * n_lat, :B], (2, 0, 1))
    pis = jnp.transpose(out[:, c_in + 2 * n_lat:, :B], (2, 0, 1))
    return predict, z_mu, log_var, pis


def init_params(key, c_in, num_gumbel, latent):
    c_enc = num_gumbel + 2 * latent
    k1, k2, k3, k4 = jax.random.split(key, 4)
    w_enc = jax.random.normal(k1, (c_in, c_enc), jnp.float32) * 0.05
    b_enc = jax.random.normal(k3, (1, c_enc), jnp.float32) * 0.1
    w_dec = jax.random.normal(k2, (num_gumbel + latent, c_in), jnp.float32) * 0.05
    b_dec = jax.random.normal(k4, (1, c_in), jnp.float32) * 0.1
    return {"w_enc": w_enc, "b_enc": b_enc, "w_dec": w_dec, "b_dec": b_dec}


if __name__ == "__main__":
    key = jax.random.PRNGKey(0)
    k_x, k_p, k_u, k_e = jax.random.split(key, 4)

    B, N, C_IN = 200, 8, 16          # batch, set size (nodes), input channels
    NUM_GUMBEL, LATENT = 4, 8        # encoder out channels = 4 + 2*8 = 20
    TEMPERATURE = 0.5

    x = jax.random.normal(k_x, (B, N, C_IN), jnp.float32)
    params = init_params(k_p, C_IN, NUM_GUMBEL, LATENT)

    # Explicit noise (torch-style (B, N, .) layout) so the whole forward,
    # including the stochastic pieces, can be checked against a JAX reference.
    u = jax.random.uniform(k_u, (B, N, NUM_GUMBEL), jnp.float32)
    eps = jax.random.normal(k_e, (B, N, LATENT), jnp.float32)

    # block_b=128 forces a multi-step grid (B=200 -> B_pad=256, 2 blocks) and
    # exercises the ragged-tail padding path.
    fwd = jax.jit(functools.partial(
        sn_bool_vae_forward, num_gumbel=NUM_GUMBEL, temperature=TEMPERATURE,
        block_b=128))
    predict, z_mu, log_var, pis = fwd(x, params, noise=(u, eps))
    jax.block_until_ready((predict, z_mu, log_var, pis))

    assert predict.shape == (B, N, C_IN)
    assert z_mu.shape == (B, N, LATENT)
    assert log_var.shape == (B, N, LATENT)
    assert pis.shape == (B, N, NUM_GUMBEL)
    assert bool(jnp.all(jnp.isfinite(predict)))

    # Pure-JAX reference of the full forward (same noise).
    hi = jax.lax.Precision.HIGHEST
    enc_r = jnp.einsum("bnc,ce->bne", x, params["w_enc"],
                       precision=hi) + params["b_enc"]
    lp_r = enc_r[..., :NUM_GUMBEL]
    lv_r = enc_r[..., NUM_GUMBEL:NUM_GUMBEL + LATENT]
    mu_r = enc_r[..., NUM_GUMBEL + LATENT:]
    gum_r = -jnp.log(-jnp.log(u + 1e-20) + 1e-20)
    xg_r = jax.nn.softmax((lp_r + gum_r) / TEMPERATURE, axis=1)
    xs_r = jnp.concatenate([xg_r, eps * jnp.exp(lv_r * 0.5) + mu_r], axis=-1)
    pred_r = jnp.einsum("bnj,jo->bno", xs_r, params["w_dec"],
                        precision=hi) + params["b_dec"]
    pis_r = jax.nn.softmax(lp_r, axis=1)

    assert bool(jnp.allclose(z_mu, mu_r, atol=2e-3))
    assert bool(jnp.allclose(log_var, lv_r, atol=2e-3))
    assert bool(jnp.allclose(pis, pis_r, atol=2e-3))
    assert bool(jnp.allclose(predict, pred_r, atol=2e-3))
    # softmax over the node dim (pdim1=1) sums to 1 (exact divide in-kernel)
    assert bool(jnp.allclose(jnp.sum(pis, axis=1), 1.0, atol=1e-4))

    print("KERNEL_OK")
</pallas_src>

<mosaic_0001>
module attributes {stable_mosaic.version = 11 : i64} {
  func.func @_fused_vae_kernel(%arg0: i32, %arg1: memref<128x128xf32, #tpu.memory_space<vmem>>, %arg2: memref<8x12x128xf32, #tpu.memory_space<vmem>>, %arg3: memref<192x128xf32, #tpu.memory_space<vmem>>, %arg4: memref<8x24x1xf32, #tpu.memory_space<vmem>>, %arg5: memref<128x128xf32, #tpu.memory_space<vmem>>, %arg6: memref<8x16x1xf32, #tpu.memory_space<vmem>>, %arg7: memref<8x36x128xf32, #tpu.memory_space<vmem>>) attributes {dimension_semantics = [#tpu.dimension_semantics<parallel>], iteration_bounds = array<i64: 2>, scalar_prefetch = 0 : i64, scratch_operands = 0 : i64, tpu.core_type = #tpu.core_type<tc>, window_params = [{transform_indices = @transform_0, window_bounds = array<i64: 128, 128>}, {transform_indices = @transform_1, window_bounds = array<i64: 8, 12, 128>}, {pipeline_mode = #tpu.pipeline_mode<synchronous>, transform_indices = @transform_2, window_bounds = array<i64: 192, 128>}, {pipeline_mode = #tpu.pipeline_mode<synchronous>, transform_indices = @transform_3, window_bounds = array<i64: 8, 24, 1>}, {pipeline_mode = #tpu.pipeline_mode<synchronous>, transform_indices = @transform_4, window_bounds = array<i64: 128, 128>}, {pipeline_mode = #tpu.pipeline_mode<synchronous>, transform_indices = @transform_5, window_bounds = array<i64: 8, 16, 1>}, {transform_indices = @transform_6, window_bounds = array<i64: 8, 36, 128>}]} {
    %c0 = arith.constant 0 : index
    %c0_0 = arith.constant 0 : index
    %0 = vector.load %arg3[%c0, %c0_0] : memref<192x128xf32, #tpu.memory_space<vmem>>, vector<192x128xf32>
    %c0_1 = arith.constant 0 : index
    %c0_2 = arith.constant 0 : index
    %1 = vector.load %arg1[%c0_1, %c0_2] : memref<128x128xf32, #tpu.memory_space<vmem>>, vector<128x128xf32>
    %cst = arith.constant dense<0.000000e+00> : vector<192x128xf32>
    %2 = tpu.matmul %0, %1, %cst {dimension_numbers = #tpu.dot_dimension_numbers<[1], [0], [0], [1], [0, 0, 1, 1], [], []>} : vector<192x128xf32>, vector<128x128xf32>, vector<192x128xf32> -> vector<192x128xf32>
    %3 = vector.shape_cast %2 : vector<192x128xf32> to vector<8x24x128xf32>
    %c0_3 = arith.constant 0 : index
    %c0_4 = arith.constant 0 : index
    %c0_5 = arith.constant 0 : index
    %4 = vector.load %arg4[%c0_3, %c0_4, %c0_5] : memref<8x24x1xf32, #tpu.memory_space<vmem>>, vector<8x24x1xf32>
    %5 = vector.broadcast %4 : vector<8x24x1xf32> to vector<8x24x128xf32>
    %6 = arith.addf %3, %5 : vector<8x24x128xf32>
    %7 = vector.extract_strided_slice %6 {offsets = [0, 0, 0], sizes = [8, 4, 128], strides = [1, 1, 1]} : vector<8x24x128xf32> to vector<8x4x128xf32>
    %8 = vector.extract_strided_slice %6 {offsets = [0, 8, 0], sizes = [8, 8, 128], strides = [1, 1, 1]} : vector<8x24x128xf32> to vector<8x8x128xf32>
    %9 = vector.extract_strided_slice %6 {offsets = [0, 16, 0], sizes = [8, 8, 128], strides = [1, 1, 1]} : vector<8x24x128xf32> to vector<8x8x128xf32>
    %c0_6 = arith.constant 0 : index
    %c8 = arith.constant 8 : index
    %c0_7 = arith.constant 0 : index
    %10 = vector.load %arg2[%c0_6, %c8, %c0_7] : memref<8x12x128xf32, #tpu.memory_space<vmem>>, vector<8x4x128xf32>
    %cst_8 = arith.constant 9.99999968E-21 : f32
    %11 = vector.broadcast %cst_8 : f32 to vector<8x4x128xf32>
    %12 = arith.addf %10, %11 : vector<8x4x128xf32>
    %13 = math.log %12 : vector<8x4x128xf32>
    %cst_9 = arith.constant 0.000000e+00 : f32
    %14 = vector.broadcast %cst_9 : f32 to vector<8x4x128xf32>
    %15 = arith.subf %14, %13 : vector<8x4x128xf32>
    %cst_10 = arith.constant 9.99999968E-21 : f32
    %16 = vector.broadcast %cst_10 : f32 to vector<8x4x128xf32>
    %17 = arith.addf %15, %16 : vector<8x4x128xf32>
    %18 = math.log %17 : vector<8x4x128xf32>
    %cst_11 = arith.constant 0.000000e+00 : f32
    %19 = vector.broadcast %cst_11 : f32 to vector<8x4x128xf32>
    %20 = arith.subf %19, %18 : vector<8x4x128xf32>
    %21 = arith.addf %7, %20 : vector<8x4x128xf32>
    %cst_12 = arith.constant 2.000000e+00 : f32
    %22 = vector.broadcast %cst_12 : f32 to vector<8x4x128xf32>
    %23 = arith.mulf %21, %22 : vector<8x4x128xf32>
    %24 = vector.extract_strided_slice %23 {offsets = [0, 0, 0], sizes = [1, 4, 128], strides = [1, 1, 1]} : vector<8x4x128xf32> to vector<1x4x128xf32>
    %25 = vector.shape_cast %24 : vector<1x4x128xf32> to vector<4x128xf32>
    %26 = vector.extract_strided_slice %23 {offsets = [1, 0, 0], sizes = [1, 4, 128], strides = [1, 1, 1]} : vector<8x4x128xf32> to vector<1x4x128xf32>
    %27 = vector.shape_cast %26 : vector<1x4x128xf32> to vector<4x128xf32>
    %28 = arith.maximumf %25, %27 : vector<4x128xf32>
    %29 = vector.extract_strided_slice %23 {offsets = [2, 0, 0], sizes = [1, 4, 128], strides = [1, 1, 1]} : vector<8x4x128xf32> to vector<1x4x128xf32>
    %30 = vector.shape_cast %29 : vector<1x4x128xf32> to vector<4x128xf32>
    %31 = arith.maximumf %28, %30 : vector<4x128xf32>
    %32 = vector.extract_strided_slice %23 {offsets = [3, 0, 0], sizes = [1, 4, 128], strides = [1, 1, 1]} : vector<8x4x128xf32> to vector<1x4x128xf32>
    %33 = vector.shape_cast %32 : vector<1x4x128xf32> to vector<4x128xf32>
    %34 = arith.maximumf %31, %33 : vector<4x128xf32>
    %35 = vector.extract_strided_slice %23 {offsets = [4, 0, 0], sizes = [1, 4, 128], strides = [1, 1, 1]} : vector<8x4x128xf32> to vector<1x4x128xf32>
    %36 = vector.shape_cast %35 : vector<1x4x128xf32> to vector<4x128xf32>
    %37 = arith.maximumf %34, %36 : vector<4x128xf32>
    %38 = vector.extract_strided_slice %23 {offsets = [5, 0, 0], sizes = [1, 4, 128], strides = [1, 1, 1]} : vector<8x4x128xf32> to vector<1x4x128xf32>
    %39 = vector.shape_cast %38 : vector<1x4x128xf32> to vector<4x128xf32>
    %40 = arith.maximumf %37, %39 : vector<4x128xf32>
    %41 = vector.extract_strided_slice %23 {offsets = [6, 0, 0], sizes = [1, 4, 128], strides = [1, 1, 1]} : vector<8x4x128xf32> to vector<1x4x128xf32>
    %42 = vector.shape_cast %41 : vector<1x4x128xf32> to vector<4x128xf32>
    %43 = arith.maximumf %40, %42 : vector<4x128xf32>
    %44 = vector.extract_strided_slice %23 {offsets = [7, 0, 0], sizes = [1, 4, 128], strides = [1, 1, 1]} : vector<8x4x128xf32> to vector<1x4x128xf32>
    %45 = vector.shape_cast %44 : vector<1x4x128xf32> to vector<4x128xf32>
    %46 = arith.maximumf %43, %45 : vector<4x128xf32>
    %47 = vector.shape_cast %46 : vector<4x128xf32> to vector<1x4x128xf32>
    %48 = vector.broadcast %47 : vector<1x4x128xf32> to vector<8x4x128xf32>
    %49 = arith.subf %23, %48 : vector<8x4x128xf32>
    %50 = math.exp %49 : vector<8x4x128xf32>
    %51 = vector.extract_strided_slice %50 {offsets = [0, 0, 0], sizes = [1, 4, 128], strides = [1, 1, 1]} : vector<8x4x128xf32> to vector<1x4x128xf32>
    %52 = vector.shape_cast %51 : vector<1x4x128xf32> to vector<4x128xf32>
    %53 = vector.extract_strided_slice %50 {offsets = [1, 0, 0], sizes = [1, 4, 128], strides = [1, 1, 1]} : vector<8x4x128xf32> to vector<1x4x128xf32>
    %54 = vector.shape_cast %53 : vector<1x4x128xf32> to vector<4x128xf32>
    %55 = arith.addf %52, %54 : vector<4x128xf32>
    %56 = vector.extract_strided_slice %50 {offsets = [2, 0, 0], sizes = [1, 4, 128], strides = [1, 1, 1]} : vector<8x4x128xf32> to vector<1x4x128xf32>
    %57 = vector.shape_cast %56 : vector<1x4x128xf32> to vector<4x128xf32>
    %58 = arith.addf %55, %57 : vector<4x128xf32>
    %59 = vector.extract_strided_slice %50 {offsets = [3, 0, 0], sizes = [1, 4, 128], strides = [1, 1, 1]} : vector<8x4x128xf32> to vector<1x4x128xf32>
    %60 = vector.shape_cast %59 : vector<1x4x128xf32> to vector<4x128xf32>
    %61 = arith.addf %58, %60 : vector<4x128xf32>
    %62 = vector.extract_strided_slice %50 {offsets = [4, 0, 0], sizes = [1, 4, 128], strides = [1, 1, 1]} : vector<8x4x128xf32> to vector<1x4x128xf32>
    %63 = vector.shape_cast %62 : vector<1x4x128xf32> to vector<4x128xf32>
    %64 = arith.addf %61, %63 : vector<4x128xf32>
    %65 = vector.extract_strided_slice %50 {offsets = [5, 0, 0], sizes = [1, 4, 128], strides = [1, 1, 1]} : vector<8x4x128xf32> to vector<1x4x128xf32>
    %66 = vector.shape_cast %65 : vector<1x4x128xf32> to vector<4x128xf32>
    %67 = arith.addf %64, %66 : vector<4x128xf32>
    %68 = vector.extract_strided_slice %50 {offsets = [6, 0, 0], sizes = [1, 4, 128], strides = [1, 1, 1]} : vector<8x4x128xf32> to vector<1x4x128xf32>
    %69 = vector.shape_cast %68 : vector<1x4x128xf32> to vector<4x128xf32>
    %70 = arith.addf %67, %69 : vector<4x128xf32>
    %71 = vector.extract_strided_slice %50 {offsets = [7, 0, 0], sizes = [1, 4, 128], strides = [1, 1, 1]} : vector<8x4x128xf32> to vector<1x4x128xf32>
    %72 = vector.shape_cast %71 : vector<1x4x128xf32> to vector<4x128xf32>
    %73 = arith.addf %70, %72 : vector<4x128xf32>
    %74 = vector.shape_cast %73 : vector<4x128xf32> to vector<1x4x128xf32>
    %75 = vector.broadcast %74 : vector<1x4x128xf32> to vector<8x4x128xf32>
    %76 = arith.divf %50, %75 : vector<8x4x128xf32>
    %c0_13 = arith.constant 0 : index
    %c0_14 = arith.constant 0 : index
    %c0_15 = arith.constant 0 : index
    %77 = vector.load %arg2[%c0_13, %c0_14, %c0_15] : memref<8x12x128xf32, #tpu.memory_space<vmem>>, vector<8x8x128xf32>
    %cst_16 = arith.constant 5.000000e-01 : f32
    %78 = vector.broadcast %cst_16 : f32 to vector<8x8x128xf32>
    %79 = arith.mulf %8, %78 : vector<8x8x128xf32>
    %80 = math.exp %79 : vector<8x8x128xf32>
    %81 = arith.mulf %77, %80 : vector<8x8x128xf32>
    %82 = arith.addf %81, %9 : vector<8x8x128xf32>
    %cst_17 = arith.constant 0.000000e+00 : f32
    %83 = vector.broadcast %cst_17 : f32 to vector<8x4x128xf32>
    %84 = tpu.concatenate %76, %83, %82 in 1 : vector<8x4x128xf32>, vector<8x4x128xf32>, vector<8x8x128xf32> -> vector<8x16x128xf32>
    %c0_18 = arith.constant 0 : index
    %c0_19 = arith.constant 0 : index
    %85 = vector.load %arg5[%c0_18, %c0_19] : memref<128x128xf32, #tpu.memory_space<vmem>>, vector<128x128xf32>
    %86 = vector.shape_cast %84 : vector<8x16x128xf32> to vector<128x128xf32>
    %cst_20 = arith.constant dense<0.000000e+00> : vector<128x128xf32>
    %87 = tpu.matmul %85, %86, %cst_20 {dimension_numbers = #tpu.dot_dimension_numbers<[1], [0], [0], [1], [0, 0, 1, 1], [], []>} : vector<128x128xf32>, vector<128x128xf32>, vector<128x128xf32> -> vector<128x128xf32>
    %88 = vector.shape_cast %87 : vector<128x128xf32> to vector<8x16x128xf32>
    %c0_21 = arith.constant 0 : index
    %c0_22 = arith.constant 0 : index
    %c0_23 = arith.constant 0 : index
    %89 = vector.load %arg6[%c0_21, %c0_22, %c0_23] : memref<8x16x1xf32, #tpu.memory_space<vmem>>, vector<8x16x1xf32>
    %90 = vector.broadcast %89 : vector<8x16x1xf32> to vector<8x16x128xf32>
    %91 = arith.addf %88, %90 : vector<8x16x128xf32>
    %92 = vector.extract_strided_slice %7 {offsets = [0, 0, 0], sizes = [1, 4, 128], strides = [1, 1, 1]} : vector<8x4x128xf32> to vector<1x4x128xf32>
    %93 = vector.shape_cast %92 : vector<1x4x128xf32> to vector<4x128xf32>
    %94 = vector.extract_strided_slice %7 {offsets = [1, 0, 0], sizes = [1, 4, 128], strides = [1, 1, 1]} : vector<8x4x128xf32> to vector<1x4x128xf32>
    %95 = vector.shape_cast %94 : vector<1x4x128xf32> to vector<4x128xf32>
    %96 = arith.maximumf %93, %95 : vector<4x128xf32>
    %97 = vector.extract_strided_slice %7 {offsets = [2, 0, 0], sizes = [1, 4, 128], strides = [1, 1, 1]} : vector<8x4x128xf32> to vector<1x4x128xf32>
    %98 = vector.shape_cast %97 : vector<1x4x128xf32> to vector<4x128xf32>
    %99 = arith.maximumf %96, %98 : vector<4x128xf32>
    %100 = vector.extract_strided_slice %7 {offsets = [3, 0, 0], sizes = [1, 4, 128], strides = [1, 1, 1]} : vector<8x4x128xf32> to vector<1x4x128xf32>
    %101 = vector.shape_cast %100 : vector<1x4x128xf32> to vector<4x128xf32>
    %102 = arith.maximumf %99, %101 : vector<4x128xf32>
    %103 = vector.extract_strided_slice %7 {offsets = [4, 0, 0], sizes = [1, 4, 128], strides = [1, 1, 1]} : vector<8x4x128xf32> to vector<1x4x128xf32>
    %104 = vector.shape_cast %103 : vector<1x4x128xf32> to vector<4x128xf32>
    %105 = arith.maximumf %102, %104 : vector<4x128xf32>
    %106 = vector.extract_strided_slice %7 {offsets = [5, 0, 0], sizes = [1, 4, 128], strides = [1, 1, 1]} : vector<8x4x128xf32> to vector<1x4x128xf32>
    %107 = vector.shape_cast %106 : vector<1x4x128xf32> to vector<4x128xf32>
    %108 = arith.maximumf %105, %107 : vector<4x128xf32>
    %109 = vector.extract_strided_slice %7 {offsets = [6, 0, 0], sizes = [1, 4, 128], strides = [1, 1, 1]} : vector<8x4x128xf32> to vector<1x4x128xf32>
    %110 = vector.shape_cast %109 : vector<1x4x128xf32> to vector<4x128xf32>
    %111 = arith.maximumf %108, %110 : vector<4x128xf32>
    %112 = vector.extract_strided_slice %7 {offsets = [7, 0, 0], sizes = [1, 4, 128], strides = [1, 1, 1]} : vector<8x4x128xf32> to vector<1x4x128xf32>
    %113 = vector.shape_cast %112 : vector<1x4x128xf32> to vector<4x128xf32>
    %114 = arith.maximumf %111, %113 : vector<4x128xf32>
    %115 = vector.shape_cast %114 : vector<4x128xf32> to vector<1x4x128xf32>
    %116 = vector.broadcast %115 : vector<1x4x128xf32> to vector<8x4x128xf32>
    %117 = arith.subf %7, %116 : vector<8x4x128xf32>
    %118 = math.exp %117 : vector<8x4x128xf32>
    %119 = vector.extract_strided_slice %118 {offsets = [0, 0, 0], sizes = [1, 4, 128], strides = [1, 1, 1]} : vector<8x4x128xf32> to vector<1x4x128xf32>
    %120 = vector.shape_cast %119 : vector<1x4x128xf32> to vector<4x128xf32>
    %121 = vector.extract_strided_slice %118 {offsets = [1, 0, 0], sizes = [1, 4, 128], strides = [1, 1, 1]} : vector<8x4x128xf32> to vector<1x4x128xf32>
    %122 = vector.shape_cast %121 : vector<1x4x128xf32> to vector<4x128xf32>
    %123 = arith.addf %120, %122 : vector<4x128xf32>
    %124 = vector.extract_strided_slice %118 {offsets = [2, 0, 0], sizes = [1, 4, 128], strides = [1, 1, 1]} : vector<8x4x128xf32> to vector<1x4x128xf32>
    %125 = vector.shape_cast %124 : vector<1x4x128xf32> to vector<4x128xf32>
    %126 = arith.addf %123, %125 : vector<4x128xf32>
    %127 = vector.extract_strided_slice %118 {offsets = [3, 0, 0], sizes = [1, 4, 128], strides = [1, 1, 1]} : vector<8x4x128xf32> to vector<1x4x128xf32>
    %128 = vector.shape_cast %127 : vector<1x4x128xf32> to vector<4x128xf32>
    %129 = arith.addf %126, %128 : vector<4x128xf32>
    %130 = vector.extract_strided_slice %118 {offsets = [4, 0, 0], sizes = [1, 4, 128], strides = [1, 1, 1]} : vector<8x4x128xf32> to vector<1x4x128xf32>
    %131 = vector.shape_cast %130 : vector<1x4x128xf32> to vector<4x128xf32>
    %132 = arith.addf %129, %131 : vector<4x128xf32>
    %133 = vector.extract_strided_slice %118 {offsets = [5, 0, 0], sizes = [1, 4, 128], strides = [1, 1, 1]} : vector<8x4x128xf32> to vector<1x4x128xf32>
    %134 = vector.shape_cast %133 : vector<1x4x128xf32> to vector<4x128xf32>
    %135 = arith.addf %132, %134 : vector<4x128xf32>
    %136 = vector.extract_strided_slice %118 {offsets = [6, 0, 0], sizes = [1, 4, 128], strides = [1, 1, 1]} : vector<8x4x128xf32> to vector<1x4x128xf32>
    %137 = vector.shape_cast %136 : vector<1x4x128xf32> to vector<4x128xf32>
    %138 = arith.addf %135, %137 : vector<4x128xf32>
    %139 = vector.extract_strided_slice %118 {offsets = [7, 0, 0], sizes = [1, 4, 128], strides = [1, 1, 1]} : vector<8x4x128xf32> to vector<1x4x128xf32>
    %140 = vector.shape_cast %139 : vector<1x4x128xf32> to vector<4x128xf32>
    %141 = arith.addf %138, %140 : vector<4x128xf32>
    %142 = vector.shape_cast %141 : vector<4x128xf32> to vector<1x4x128xf32>
    %143 = vector.broadcast %142 : vector<1x4x128xf32> to vector<8x4x128xf32>
    %144 = arith.divf %118, %143 : vector<8x4x128xf32>
    %c0_24 = arith.constant 0 : index
    %c0_25 = arith.constant 0 : index
    %c0_26 = arith.constant 0 : index
    %145 = vector.load %arg7[%c0_24, %c0_25, %c0_26] : memref<8x36x128xf32, #tpu.memory_space<vmem>>, vector<8x16x128xf32>
    tpu.vector_store %arg7[%c0_24, %c0_25, %c0_26], %91 {strides = array<i32>} : memref<8x36x128xf32, #tpu.memory_space<vmem>>, vector<8x16x128xf32>,
    %c0_27 = arith.constant 0 : index
    %c16 = arith.constant 16 : index
    %c0_28 = arith.constant 0 : index
    %146 = vector.load %arg7[%c0_27, %c16, %c0_28] : memref<8x36x128xf32, #tpu.memory_space<vmem>>, vector<8x8x128xf32>
    tpu.vector_store %arg7[%c0_27, %c16, %c0_28], %9 {strides = array<i32>} : memref<8x36x128xf32, #tpu.memory_space<vmem>>, vector<8x8x128xf32>,
    %c0_29 = arith.constant 0 : index
    %c24 = arith.constant 24 : index
    %c0_30 = arith.constant 0 : index
    %147 = vector.load %arg7[%c0_29, %c24, %c0_30] : memref<8x36x128xf32, #tpu.memory_space<vmem>>, vector<8x8x128xf32>
    tpu.vector_store %arg7[%c0_29, %c24, %c0_30], %8 {strides = array<i32>} : memref<8x36x128xf32, #tpu.memory_space<vmem>>, vector<8x8x128xf32>,
    %c0_31 = arith.constant 0 : index
    %c32 = arith.constant 32 : index
    %c0_32 = arith.constant 0 : index
    %148 = vector.load %arg7[%c0_31, %c32, %c0_32] : memref<8x36x128xf32, #tpu.memory_space<vmem>>, vector<8x4x128xf32>
    tpu.vector_store %arg7[%c0_31, %c32, %c0_32], %144 {strides = array<i32>} : memref<8x36x128xf32, #tpu.memory_space<vmem>>, vector<8x4x128xf32>,
    return
  }
  func.func @transform_0(%arg0: i32) -> (i32, i32) {
    %c0_i32 = arith.constant 0 : i32
    %c0_i32_0 = arith.constant 0 : i32
    return %c0_i32, %arg0 : i32, i32
  }
  func.func @transform_1(%arg0: i32) -> (i32, i32, i32) {
    %c0_i32 = arith.constant 0 : i32
    %c0_i32_0 = arith.constant 0 : i32
    %c0_i32_1 = arith.constant 0 : i32
    return %c0_i32, %c0_i32_0, %arg0 : i32, i32, i32
  }
  func.func @transform_2(%arg0: i32) -> (i32, i32) {
    %c0_i32 = arith.constant 0 : i32
    %c0_i32_0 = arith.constant 0 : i32
    %c0_i32_1 = arith.constant 0 : i32
    return %c0_i32, %c0_i32_0 : i32, i32
  }
  func.func @transform_3(%arg0: i32) -> (i32, i32, i32) {
    %c0_i32 = arith.constant 0 : i32
    %c0_i32_0 = arith.constant 0 : i32
    %c0_i32_1 = arith.constant 0 : i32
    %c0_i32_2 = arith.constant 0 : i32
    return %c0_i32, %c0_i32_0, %c0_i32_1 : i32, i32, i32
  }
  func.func @transform_4(%arg0: i32) -> (i32, i32) {
    %c0_i32 = arith.constant 0 : i32
    %c0_i32_0 = arith.constant 0 : i32
    %c0_i32_1 = arith.constant 0 : i32
    return %c0_i32, %c0_i32_0 : i32, i32
  }
  func.func @transform_5(%arg0: i32) -> (i32, i32, i32) {
    %c0_i32 = arith.constant 0 : i32
    %c0_i32_0 = arith.constant 0 : i32
    %c0_i32_1 = arith.constant 0 : i32
    %c0_i32_2 = arith.constant 0 : i32
    return %c0_i32, %c0_i32_0, %c0_i32_1 : i32, i32, i32
  }
  func.func @transform_6(%arg0: i32) -> (i32, i32, i32) {
    %c0_i32 = arith.constant 0 : i32
    %c0_i32_0 = arith.constant 0 : i32
    %c0_i32_1 = arith.constant 0 : i32
    return %c0_i32, %c0_i32_0, %arg0 : i32, i32, i32
  }
}

</mosaic_0001>

<llo_original>
// kernel: sn_bool_vae_forward.1
$region0: #{sn_bool_vae_forward.1}
  #allocation0 [shape = 'u32[]', space=smem, size = 0x4, offset = 0x4, fixed_abs, tag = 'smem constant byte address 0x4 - core index']
  #allocation1 [shape = 'u32[144,128]{1,0:T(1,128)}', space=vmem, size = 0x12000, scoped, tag = 'internal scratch']
  %s0 = inlined_call_operand.vmem [shape: f32[128,256], index: 0, kind: input, shape index: {}]
  %s1 = inlined_call_operand.vmem [shape: f32[8,12,256], index: 1, kind: input, shape index: {}]
  %s2 = inlined_call_operand.vmem [shape: f32[192,128], index: 2, kind: input, shape index: {}]
  %s3 = inlined_call_operand.vmem [shape: f32[8,24,1], index: 3, kind: input, shape index: {}]
  %s4 = inlined_call_operand.vmem [shape: f32[128,128], index: 4, kind: input, shape index: {}]
  %s5 = inlined_call_operand.vmem [shape: f32[8,16,1], index: 5, kind: input, shape index: {}]
  %s6 = inlined_call_operand.vmem [shape: f32[8,36,256], index: 6, kind: output, shape index: {}]
  %s7 = sld [smem:[#allocation0]]
  $region167: #{sn_bool_vae_forward.1} parent=0
    _
  %s9 = ssub.s32 1, %s7
  %s10 = scalar_select 0, %s9, %s7
  $region1: #{sn_bool_vae_forward.1} parent=0
    #allocation2 [shape = 'u8[131072]{0}', space=vmem, size = 0x20000, scoped, tag = 'input window, operand 0']
    #allocation3 [shape = 'u8[131072]{0}', space=vmem, size = 0x20000, scoped, tag = 'input window, operand 1']
    #allocation4 [shape = 'u8[327680]{0}', space=vmem, size = 0x50000, scoped, tag = 'output window, operand 0']
    loop: start=0, step=1, limit=4
    $region2: #{sn_bool_vae_forward.1} parent=1 // loop_pre_header
      _
    $region3: #{sn_bool_vae_forward.1} parent=1 // loop_header
      %s12 = sphi 0, %s16
      %p13 = scmp.ge.s32.totalorder %s12, 4
      %s22 = sphi 0, %s24
      %s25 = sphi 0, %s22
      %s26 = sphi 0, %s25
      %s42 = sphi 0, %s26
      %s48 = sphi 0, %s50
      %s51 = sphi 0, %s48
      %s52 = sphi 0, %s51
      %s68 = sphi 0, %s52
      %s72 = sphi 0, %s72
      %s74 = sphi 0, %s72
      %s75 = sphi 0, %s74
      %s89 = sphi 0, %s75
      %s93 = sphi 0, %s93
      %s95 = sphi 0, %s93
      %s96 = sphi 0, %s95
      %s110 = sphi 0, %s96
      %s114 = sphi 0, %s114
      %s116 = sphi 0, %s114
      %s117 = sphi 0, %s116
      %s131 = sphi 0, %s117
      %s135 = sphi 0, %s135
      %s137 = sphi 0, %s135
      %s138 = sphi 0, %s137
      %s152 = sphi 0, %s138
      %s158 = sphi 0, %s160
      %s161 = sphi 0, %s158
      %s162 = sphi 0, %s161
      %s178 = sphi 0, %s162
    $region4: #{sn_bool_vae_forward.1} parent=1 // loop_header_branch
      %15 = sbr.rel (%p13) target = $region8
    $region5: #{sn_bool_vae_forward.1} parent=1 // loop_body
      %s17 = ssub.s32 %s12, 1
      %s18 = ssub.s32 %s12, 2
      %s19 = sadd.s32 %s12, 1
      %s20 = ssub.s32 %s12, %s19
      %p21 = scmp.eq.s32.totalorder %s20, 0
      %s23 = sadd.s32 %s22, 1
      %s24 = scalar_select %p21, %s22, %s23
      %p27 = pneg %p21
      %p28 = scmp.eq.s32.totalorder %s12, 1
      %p29 = por %p27, %p28
      %p30 = scmp.ne.s32.totalorder %s22, %s25
      %p31 = scmp.eq.s32.totalorder %s12, 0
      %p32 = por %p30, %p31
      %p33 = scmp.ne.s32.totalorder %s22, %s25
      %p34 = scmp.eq.s32.totalorder %s17, 1
      %p35 = por %p33, %p34
      %p36 = scmp.ne.s32.totalorder %s25, %s26
      %p37 = scmp.eq.s32.totalorder %s17, 0
      %p38 = por %p36, %p37
      %p39 = scmp.ne.s32.totalorder %s25, %s26
      %p40 = scmp.eq.s32.totalorder %s18, 1
      %p41 = por %p39, %p40
      %p43 = scmp.ne.s32.totalorder %s26, %s42
      %p44 = scmp.eq.s32.totalorder %s18, 0
      %p45 = por %p43, %p44
      %s46 = ssub.s32 %s12, %s19
      %p47 = scmp.eq.s32.totalorder %s46, 0
      %s49 = sadd.s32 %s48, 1
      %s50 = scalar_select %p47, %s48, %s49
      %p53 = pneg %p47
      %p54 = scmp.eq.s32.totalorder %s12, 1
      %p55 = por %p53, %p54
      %p56 = scmp.ne.s32.totalorder %s48, %s51
      %p57 = scmp.eq.s32.totalorder %s12, 0
      %p58 = por %p56, %p57
      %p59 = scmp.ne.s32.totalorder %s48, %s51
      %p60 = scmp.eq.s32.totalorder %s17, 1
      %p61 = por %p59, %p60
      %p62 = scmp.ne.s32.totalorder %s51, %s52
      %p63 = scmp.eq.s32.totalorder %s17, 0
      %p64 = por %p62, %p63
      %p65 = scmp.ne.s32.totalorder %s51, %s52
      %p66 = scmp.eq.s32.totalorder %s18, 1
      %p67 = por %p65, %p66
      %p69 = scmp.ne.s32.totalorder %s52, %s68
      %p70 = scmp.eq.s32.totalorder %s18, 0
      %p71 = por %p69, %p70
      %s73 = sadd.s32 %s72, 1
      %p76 = scmp.eq.s32.totalorder %s12, 1
      %p77 = scmp.ne.s32.totalorder %s72, %s74
      %p78 = scmp.eq.s32.totalorder %s12, 0
      %p79 = por %p77, %p78
      %p80 = scmp.ne.s32.totalorder %s72, %s74
      %p81 = scmp.eq.s32.totalorder %s17, 1
      %p82 = por %p80, %p81
      %p83 = scmp.ne.s32.totalorder %s74, %s75
      %p84 = scmp.eq.s32.totalorder %s17, 0
      %p85 = por %p83, %p84
      %p86 = scmp.ne.s32.totalorder %s74, %s75
      %p87 = scmp.eq.s32.totalorder %s18, 1
      %p88 = por %p86, %p87
      %p90 = scmp.ne.s32.totalorder %s75, %s89
      %p91 = scmp.eq.s32.totalorder %s18, 0
      %p92 = por %p90, %p91
      %s94 = sadd.s32 %s93, 1
      %p97 = scmp.eq.s32.totalorder %s12, 1
      %p98 = scmp.ne.s32.totalorder %s93, %s95
      %p99 = scmp.eq.s32.totalorder %s12, 0
      %p100 = por %p98, %p99
      %p101 = scmp.ne.s32.totalorder %s93, %s95
      %p102 = scmp.eq.s32.totalorder %s17, 1
      %p103 = por %p101, %p102
      %p104 = scmp.ne.s32.totalorder %s95, %s96
      %p105 = scmp.eq.s32.totalorder %s17, 0
      %p106 = por %p104, %p105
      %p107 = scmp.ne.s32.totalorder %s95, %s96
      %p108 = scmp.eq.s32.totalorder %s18, 1
      %p109 = por %p107, %p108
      %p111 = scmp.ne.s32.totalorder %s96, %s110
      %p112 = scmp.eq.s32.totalorder %s18, 0
      %p113 = por %p111, %p112
      %s115 = sadd.s32 %s114, 1
      %p118 = scmp.eq.s32.totalorder %s12, 1
      %p119 = scmp.ne.s32.totalorder %s114, %s116
      %p120 = scmp.eq.s32.totalorder %s12, 0
      %p121 = por %p119, %p120
      %p122 = scmp.ne.s32.totalorder %s114, %s116
      %p123 = scmp.eq.s32.totalorder %s17, 1
      %p124 = por %p122, %p123
      %p125 = scmp.ne.s32.totalorder %s116, %s117
      %p126 = scmp.eq.s32.totalorder %s17, 0
      %p127 = por %p125, %p126
      %p128 = scmp.ne.s32.totalorder %s116, %s117
      %p129 = scmp.eq.s32.totalorder %s18, 1
      %p130 = por %p128, %p129
      %p132 = scmp.ne.s32.totalorder %s117, %s131
      %p133 = scmp.eq.s32.totalorder %s18, 0
      %p134 = por %p132, %p133
      %s136 = sadd.s32 %s135, 1
      %p139 = scmp.eq.s32.totalorder %s12, 1
      %p140 = scmp.ne.s32.totalorder %s135, %s137
      %p141 = scmp.eq.s32.totalorder %s12, 0
      %p142 = por %p140, %p141
      %p143 = scmp.ne.s32.totalorder %s135, %s137
      %p144 = scmp.eq.s32.totalorder %s17, 1
      %p145 = por %p143, %p144
      %p146 = scmp.ne.s32.totalorder %s137, %s138
      %p147 = scmp.eq.s32.totalorder %s17, 0
      %p148 = por %p146, %p147
      %p149 = scmp.ne.s32.totalorder %s137, %s138
      %p150 = scmp.eq.s32.totalorder %s18, 1
      %p151 = por %p149, %p150
      %p153 = scmp.ne.s32.totalorder %s138, %s152
      %p154 = scmp.eq.s32.totalorder %s18, 0
      %p155 = por %p153, %p154
      %s156 = ssub.s32 %s12, %s19
      %p157 = scmp.eq.s32.totalorder %s156, 0
      %s159 = sadd.s32 %s158, 1
      %s160 = scalar_select %p157, %s158, %s159
      %p163 = pneg %p157
      %p164 = scmp.eq.s32.totalorder %s12, 1
      %p165 = por %p163, %p164
      %p166 = scmp.ne.s32.totalorder %s158, %s161
      %p167 = scmp.eq.s32.totalorder %s12, 0
      %p168 = por %p166, %p167
      %p169 = scmp.ne.s32.totalorder %s158, %s161
      %p170 = scmp.eq.s32.totalorder %s17, 1
      %p171 = por %p169, %p170
      %p172 = scmp.ne.s32.totalorder %s161, %s162
      %p173 = scmp.eq.s32.totalorder %s17, 0
      %p174 = por %p172, %p173
      %p175 = scmp.ne.s32.totalorder %s161, %s162
      %p176 = scmp.eq.s32.totalorder %s18, 1
      %p177 = por %p175, %p176
      %p179 = scmp.ne.s32.totalorder %s162, %s178
      %p180 = scmp.eq.s32.totalorder %s18, 0
      %p181 = por %p179, %p180
      %p182 = scmp.le.s32.totalorder 1, %s12
      %p183 = scmp.lt.s32.totalorder %s12, 3
      %p184 = pnand %p182, %p183
      %p185 = pneg %p184
      // Predicated region
      $region9: #{sn_bool_vae_forward.1} parent=5 // pred_check
        _
      $region10: #{sn_bool_vae_forward.1} parent=5 // pred_check_branch
        %187 = sbr.rel (%p184) target = $region12
      $region11: #{sn_bool_vae_forward.1} parent=5 // pred_region
        %s188 = ssub.s32 %s12, 1
        // Predicated region
        $region13: #{sn_bool_vae_forward.1} parent=11 // pred_check
          %p189 = pneg %p85
        $region14: #{sn_bool_vae_forward.1} parent=11 // pred_check_branch
          %191 = sbr.rel (%p189) target = $region16
        $region15: #{sn_bool_vae_forward.1} parent=11 // pred_region
          _
        $region16: #{sn_bool_vae_forward.1} parent=11 // pred_fallthru
          _
        // Predicated region
        $region17: #{sn_bool_vae_forward.1} parent=11 // pred_check
          %p192 = pneg %p106
        $region18: #{sn_bool_vae_forward.1} parent=11 // pred_check_branch
          %194 = sbr.rel (%p192) target = $region20
        $region19: #{sn_bool_vae_forward.1} parent=11 // pred_region
          _
        $region20: #{sn_bool_vae_forward.1} parent=11 // pred_fallthru
          _
        // Predicated region
        $region21: #{sn_bool_vae_forward.1} parent=11 // pred_check
          %p195 = pneg %p127
        $region22: #{sn_bool_vae_forward.1} parent=11 // pred_check_branch
          %197 = sbr.rel (%p195) target = $region24
        $region23: #{sn_bool_vae_forward.1} parent=11 // pred_region
          _
        $region24: #{sn_bool_vae_forward.1} parent=11 // pred_fallthru
          _
        // Predicated region
        $region25: #{sn_bool_vae_forward.1} parent=11 // pred_check
          %p198 = pneg %p148
        $region26: #{sn_bool_vae_forward.1} parent=11 // pred_check_branch
          %200 = sbr.rel (%p198) target = $region28
        $region27: #{sn_bool_vae_forward.1} parent=11 // pred_region
          _
        $region28: #{sn_bool_vae_forward.1} parent=11 // pred_fallthru
          _
      $region12: #{sn_bool_vae_forward.1} parent=5 // pred_fallthru
        _
      %p201 = scmp.lt.s32.totalorder %s12, 2
      // Predicated region
      $region29: #{sn_bool_vae_forward.1} parent=5 // pred_check
        %p202 = pneg %p201
      $region30: #{sn_bool_vae_forward.1} parent=5 // pred_check_branch
        %204 = sbr.rel (%p202) target = $region32
      $region31: #{sn_bool_vae_forward.1} parent=5 // pred_region
        // Predicated region
        $region33: #{sn_bool_vae_forward.1} parent=31 // pred_check
          %p205 = pneg %p32
        $region34: #{sn_bool_vae_forward.1} parent=31 // pred_check_branch
          %207 = sbr.rel (%p205) target = $region36
        $region35: #{sn_bool_vae_forward.1} parent=31 // pred_region
          %s208 = sand.u32 %s22, 1
          %s209 = sand.u32 %s22, 1
          %s210 = smul.addr %s209, 128
          %s211 = scalar_lea.vmem [#allocation2], %s210
          %s212 = smul.addr %s12, 8
          %s213 = scalar_lea.vmem %s0, %s212
          // Predicated region
          $region37: #{sn_bool_vae_forward.1} parent=35 // pred_check
            _
          $region38: #{sn_bool_vae_forward.1} parent=35 // pred_check_branch
            %215 = sbr.rel (0) target = $region40
          $region39: #{sn_bool_vae_forward.1} parent=35 // pred_region
            // Predicated region
            $region41: #{sn_bool_vae_forward.1} parent=39 // pred_check
              _
            $region42: #{sn_bool_vae_forward.1} parent=39 // pred_check_branch
              %217 = sbr.rel (0) target = $region44
            $region43: #{sn_bool_vae_forward.1} parent=39 // pred_region
              // Predicated region
              $region56: #{sn_bool_vae_forward.1} parent=43 // pred_check
                _
              $region57: #{sn_bool_vae_forward.1} parent=43 // pred_check_branch
                %262 = sbr.rel (0) target = $region59
              $region58: #{sn_bool_vae_forward.1} parent=43 // pred_region
                loop: start=0, step=1, limit=1
                $region60: #{sn_bool_vae_forward.1} parent=58 // loop_pre_header
                  _
                $region61: #{sn_bool_vae_forward.1} parent=58 // loop_header
                  %s264 = sphi 0, %s268
                  %p265 = scmp.ge.s32.totalorder %s264, 1
                  %s269 = sphi %s213, %s213
                  %s270 = sphi %s211, %s211
                $region62: #{sn_bool_vae_forward.1} parent=58 // loop_header_branch
                  %267 = sbr.rel (%p265) target = $region66
                $region63: #{sn_bool_vae_forward.1} parent=58 // loop_body
                  %v271 = vld [vmem:[%s269] sm:$0xff]
                  %272 = vst [vmem:[%s270] sm:$0xff] %v271
                  %v273 = vld [vmem:[%s269 + $0x10] sm:$0xff]
                  %274 = vst [vmem:[%s270 + $0x8] sm:$0xff] %v273
                  %v275 = vld [vmem:[%s269 + $0x20] sm:$0xff]
                  %276 = vst [vmem:[%s270 + $0x10] sm:$0xff] %v275
                  %v277 = vld [vmem:[%s269 + $0x30] sm:$0xff]
                  %278 = vst [vmem:[%s270 + $0x18] sm:$0xff] %v277
                  %v279 = vld [vmem:[%s269 + $0x40] sm:$0xff]
                  %280 = vst [vmem:[%s270 + $0x20] sm:$0xff] %v279
                  %v281 = vld [vmem:[%s269 + $0x50] sm:$0xff]
                  %282 = vst [vmem:[%s270 + $0x28] sm:$0xff] %v281
                  %v283 = vld [vmem:[%s269 + $0x60] sm:$0xff]
                  %284 = vst [vmem:[%s270 + $0x30] sm:$0xff] %v283
                  %v285 = vld [vmem:[%s269 + $0x70] sm:$0xff]
                  %286 = vst [vmem:[%s270 + $0x38] sm:$0xff] %v285
                  %v287 = vld [vmem:[%s269 + $0x80] sm:$0xff]
                  %288 = vst [vmem:[%s270 + $0x40] sm:$0xff] %v287
                  %v289 = vld [vmem:[%s269 + $0x90] sm:$0xff]
                  %290 = vst [vmem:[%s270 + $0x48] sm:$0xff] %v289
                  %v291 = vld [vmem:[%s269 + $0xa0] sm:$0xff]
                  %292 = vst [vmem:[%s270 + $0x50] sm:$0xff] %v291
                  %v293 = vld [vmem:[%s269 + $0xb0] sm:$0xff]
                  %294 = vst [vmem:[%s270 + $0x58] sm:$0xff] %v293
                  %v295 = vld [vmem:[%s269 + $0xc0] sm:$0xff]
                  %296 = vst [vmem:[%s270 + $0x60] sm:$0xff] %v295
                  %v297 = vld [vmem:[%s269 + $0xd0] sm:$0xff]
                  %298 = vst [vmem:[%s270 + $0x68] sm:$0xff] %v297
                  %v299 = vld [vmem:[%s269 + $0xe0] sm:$0xff]
                  %300 = vst [vmem:[%s270 + $0x70] sm:$0xff] %v299
                  %v301 = vld [vmem:[%s269 + $0xf0] sm:$0xff]
                  %302 = vst [vmem:[%s270 + $0x78] sm:$0xff] %v301
                $region64: #{sn_bool_vae_forward.1} parent=58 // loop_footer
                  %s268 = sadd.s32 1, %s264
                $region65: #{sn_bool_vae_forward.1} parent=58 // loop_footer_branch
                  %263 = sbr.rel target = $region61
                $region66: #{sn_bool_vae_forward.1} parent=58 // loop_exit
                  _
              $region59: #{sn_bool_vae_forward.1} parent=43 // pred_fallthru
                _
              // Predicated region
              $region67: #{sn_bool_vae_forward.1} parent=43 // pred_check
                _
              $region68: #{sn_bool_vae_forward.1} parent=43 // pred_check_branch
                %304 = sbr.rel target = $region70
              $region69: #{sn_bool_vae_forward.1} parent=43 // pred_region
                _
              $region70: #{sn_bool_vae_forward.1} parent=43 // pred_fallthru
                _
            $region44: #{sn_bool_vae_forward.1} parent=39 // pred_fallthru
              _
            // Predicated region
            $region45: #{sn_bool_vae_forward.1} parent=39 // pred_check
              _
            $region46: #{sn_bool_vae_forward.1} parent=39 // pred_check_branch
              %219 = sbr.rel target = $region48
            $region47: #{sn_bool_vae_forward.1} parent=39 // pred_region
              loop: start=0, step=1, limit=1
              $region49: #{sn_bool_vae_forward.1} parent=47 // loop_pre_header
                _
              $region50: #{sn_bool_vae_forward.1} parent=47 // loop_header
                %s222 = sphi 0, %s226
                %p223 = scmp.ge.s32.totalorder %s222, 1
                %s227 = sphi %s213, %s213
                %s228 = sphi %s211, %s211
              $region51: #{sn_bool_vae_forward.1} parent=47 // loop_header_branch
                %225 = sbr.rel (%p223) target = $region55
              $region52: #{sn_bool_vae_forward.1} parent=47 // loop_body
                %v229 = vld [vmem:[%s227] sm:$0xff]
                %230 = vst [vmem:[%s228] sm:$0xff] %v229
                %v231 = vld [vmem:[%s227 + $0x10] sm:$0xff]
                %232 = vst [vmem:[%s228 + $0x8] sm:$0xff] %v231
                %v233 = vld [vmem:[%s227 + $0x20] sm:$0xff]
                %234 = vst [vmem:[%s228 + $0x10] sm:$0xff] %v233
                %v235 = vld [vmem:[%s227 + $0x30] sm:$0xff]
                %236 = vst [vmem:[%s228 + $0x18] sm:$0xff] %v235
                %v237 = vld [vmem:[%s227 + $0x40] sm:$0xff]
                %238 = vst [vmem:[%s228 + $0x20] sm:$0xff] %v237
                %v239 = vld [vmem:[%s227 + $0x50] sm:$0xff]
                %240 = vst [vmem:[%s228 + $0x28] sm:$0xff] %v239
                %v241 = vld [vmem:[%s227 + $0x60] sm:$0xff]
                %242 = vst [vmem:[%s228 + $0x30] sm:$0xff] %v241
                %v243 = vld [vmem:[%s227 + $0x70] sm:$0xff]
                %244 = vst [vmem:[%s228 + $0x38] sm:$0xff] %v243
                %v245 = vld [vmem:[%s227 + $0x80] sm:$0xff]
                %246 = vst [vmem:[%s228 + $0x40] sm:$0xff] %v245
                %v247 = vld [vmem:[%s227 + $0x90] sm:$0xff]
                %248 = vst [vmem:[%s228 + $0x48] sm:$0xff] %v247
                %v249 = vld [vmem:[%s227 + $0xa0] sm:$0xff]
                %250 = vst [vmem:[%s228 + $0x50] sm:$0xff] %v249
                %v251 = vld [vmem:[%s227 + $0xb0] sm:$0xff]
                %252 = vst [vmem:[%s228 + $0x58] sm:$0xff] %v251
                %v253 = vld [vmem:[%s227 + $0xc0] sm:$0xff]
                %254 = vst [vmem:[%s228 + $0x60] sm:$0xff] %v253
                %v255 = vld [vmem:[%s227 + $0xd0] sm:$0xff]
                %256 = vst [vmem:[%s228 + $0x68] sm:$0xff] %v255
                %v257 = vld [vmem:[%s227 + $0xe0] sm:$0xff]
                %258 = vst [vmem:[%s228 + $0x70] sm:$0xff] %v257
                %v259 = vld [vmem:[%s227 + $0xf0] sm:$0xff]
                %260 = vst [vmem:[%s228 + $0x78] sm:$0xff] %v259
              $region53: #{sn_bool_vae_forward.1} parent=47 // loop_footer
                %s226 = sadd.s32 1, %s222
              $region54: #{sn_bool_vae_forward.1} parent=47 // loop_footer_branch
                %221 = sbr.rel target = $region50
              $region55: #{sn_bool_vae_forward.1} parent=47 // loop_exit
                _
            $region48: #{sn_bool_vae_forward.1} parent=39 // pred_fallthru
              _
          $region40: #{sn_bool_vae_forward.1} parent=35 // pred_fallthru
            _
          %305 = vnop
        $region36: #{sn_bool_vae_forward.1} parent=31 // pred_fallthru
          _
        // Predicated region
        $region71: #{sn_bool_vae_forward.1} parent=31 // pred_check
          %p306 = pneg %p58
        $region72: #{sn_bool_vae_forward.1} parent=31 // pred_check_branch
          %308 = sbr.rel (%p306) target = $region74
        $region73: #{sn_bool_vae_forward.1} parent=31 // pred_region
          %s309 = sand.u32 %s48, 1
          %s310 = sand.u32 %s48, 1
          %s311 = smul.addr %s310, 128
          %s312 = scalar_lea.vmem [#allocation3], %s311
          %s313 = smul.addr %s12, 8
          %s314 = scalar_lea.vmem %s1, %s313
          // Predicated region
          $region75: #{sn_bool_vae_forward.1} parent=73 // pred_check
            _
          $region76: #{sn_bool_vae_forward.1} parent=73 // pred_check_branch
            %316 = sbr.rel (0) target = $region78
          $region77: #{sn_bool_vae_forward.1} parent=73 // pred_region
            // Predicated region
            $region79: #{sn_bool_vae_forward.1} parent=77 // pred_check
              _
            $region80: #{sn_bool_vae_forward.1} parent=77 // pred_check_branch
              %318 = sbr.rel (0) target = $region82
            $region81: #{sn_bool_vae_forward.1} parent=77 // pred_region
              // Predicated region
              $region94: #{sn_bool_vae_forward.1} parent=81 // pred_check
                _
              $region95: #{sn_bool_vae_forward.1} parent=81 // pred_check_branch
                %363 = sbr.rel (0) target = $region97
              $region96: #{sn_bool_vae_forward.1} parent=81 // pred_region
                loop: start=0, step=1, limit=1
                $region98: #{sn_bool_vae_forward.1} parent=96 // loop_pre_header
                  _
                $region99: #{sn_bool_vae_forward.1} parent=96 // loop_header
                  %s365 = sphi 0, %s369
                  %p366 = scmp.ge.s32.totalorder %s365, 1
                  %s370 = sphi %s314, %s314
                  %s371 = sphi %s312, %s312
                $region100: #{sn_bool_vae_forward.1} parent=96 // loop_header_branch
                  %368 = sbr.rel (%p366) target = $region104
                $region101: #{sn_bool_vae_forward.1} parent=96 // loop_body
                  %v372 = vld [vmem:[%s370] sm:$0xff]
                  %373 = vst [vmem:[%s371] sm:$0xff] %v372
                  %v374 = vld [vmem:[%s370 + $0x10] sm:$0xff]
                  %375 = vst [vmem:[%s371 + $0x8] sm:$0xff] %v374
                  %v376 = vld [vmem:[%s370 + $0x20] sm:$0xff]
                  %377 = vst [vmem:[%s371 + $0x10] sm:$0xff] %v376
                  %v378 = vld [vmem:[%s370 + $0x30] sm:$0xff]
                  %379 = vst [vmem:[%s371 + $0x18] sm:$0xff] %v378
                  %v380 = vld [vmem:[%s370 + $0x40] sm:$0xff]
                  %381 = vst [vmem:[%s371 + $0x20] sm:$0xff] %v380
                  %v382 = vld [vmem:[%s370 + $0x50] sm:$0xff]
                  %383 = vst [vmem:[%s371 + $0x28] sm:$0xff] %v382
                  %v384 = vld [vmem:[%s370 + $0x60] sm:$0xff]
                  %385 = vst [vmem:[%s371 + $0x30] sm:$0xff] %v384
                  %v386 = vld [vmem:[%s370 + $0x70] sm:$0xff]
                  %387 = vst [vmem:[%s371 + $0x38] sm:$0xff] %v386
                  %v388 = vld [vmem:[%s370 + $0x80] sm:$0xff]
                  %389 = vst [vmem:[%s371 + $0x40] sm:$0xff] %v388
                  %v390 = vld [vmem:[%s370 + $0x90] sm:$0xff]
                  %391 = vst [vmem:[%s371 + $0x48] sm:$0xff] %v390
                  %v392 = vld [vmem:[%s370 + $0xa0] sm:$0xff]
                  %393 = vst [vmem:[%s371 + $0x50] sm:$0xff] %v392
                  %v394 = vld [vmem:[%s370 + $0xb0] sm:$0xff]
                  %395 = vst [vmem:[%s371 + $0x58] sm:$0xff] %v394
                  %v396 = vld [vmem:[%s370 + $0xc0] sm:$0xff]
                  %397 = vst [vmem:[%s371 + $0x60] sm:$0xff] %v396
                  %v398 = vld [vmem:[%s370 + $0xd0] sm:$0xff]
                  %399 = vst [vmem:[%s371 + $0x68] sm:$0xff] %v398
                  %v400 = vld [vmem:[%s370 + $0xe0] sm:$0xff]
                  %401 = vst [vmem:[%s371 + $0x70] sm:$0xff] %v400
                  %v402 = vld [vmem:[%s370 + $0xf0] sm:$0xff]
                  %403 = vst [vmem:[%s371 + $0x78] sm:$0xff] %v402
                $region102: #{sn_bool_vae_forward.1} parent=96 // loop_footer
                  %s369 = sadd.s32 1, %s365
                $region103: #{sn_bool_vae_forward.1} parent=96 // loop_footer_branch
                  %364 = sbr.rel target = $region99
                $region104: #{sn_bool_vae_forward.1} parent=96 // loop_exit
                  _
              $region97: #{sn_bool_vae_forward.1} parent=81 // pred_fallthru
                _
              // Predicated region
              $region105: #{sn_bool_vae_forward.1} parent=81 // pred_check
                _
              $region106: #{sn_bool_vae_forward.1} parent=81 // pred_check_branch
                %405 = sbr.rel target = $region108
              $region107: #{sn_bool_vae_forward.1} parent=81 // pred_region
                _
              $region108: #{sn_bool_vae_forward.1} parent=81 // pred_fallthru
                _
            $region82: #{sn_bool_vae_forward.1} parent=77 // pred_fallthru
              _
            // Predicated region
            $region83: #{sn_bool_vae_forward.1} parent=77 // pred_check
              _
            $region84: #{sn_bool_vae_forward.1} parent=77 // pred_check_branch
              %320 = sbr.rel target = $region86
            $region85: #{sn_bool_vae_forward.1} parent=77 // pred_region
              loop: start=0, step=1, limit=1
              $region87: #{sn_bool_vae_forward.1} parent=85 // loop_pre_header
                _
              $region88: #{sn_bool_vae_forward.1} parent=85 // loop_header
                %s323 = sphi 0, %s327
                %p324 = scmp.ge.s32.totalorder %s323, 1
                %s328 = sphi %s314, %s314
                %s329 = sphi %s312, %s312
              $region89: #{sn_bool_vae_forward.1} parent=85 // loop_header_branch
                %326 = sbr.rel (%p324) target = $region93
              $region90: #{sn_bool_vae_forward.1} parent=85 // loop_body
                %v330 = vld [vmem:[%s328] sm:$0xff]
                %331 = vst [vmem:[%s329] sm:$0xff] %v330
                %v332 = vld [vmem:[%s328 + $0x10] sm:$0xff]
                %333 = vst [vmem:[%s329 + $0x8] sm:$0xff] %v332
                %v334 = vld [vmem:[%s328 + $0x20] sm:$0xff]
                %335 = vst [vmem:[%s329 + $0x10] sm:$0xff] %v334
                %v336 = vld [vmem:[%s328 + $0x30] sm:$0xff]
                %337 = vst [vmem:[%s329 + $0x18] sm:$0xff] %v336
                %v338 = vld [vmem:[%s328 + $0x40] sm:$0xff]
                %339 = vst [vmem:[%s329 + $0x20] sm:$0xff] %v338
                %v340 = vld [vmem:[%s328 + $0x50] sm:$0xff]
                %341 = vst [vmem:[%s329 + $0x28] sm:$0xff] %v340
                %v342 = vld [vmem:[%s328 + $0x60] sm:$0xff]
                %343 = vst [vmem:[%s329 + $0x30] sm:$0xff] %v342
                %v344 = vld [vmem:[%s328 + $0x70] sm:$0xff]
                %345 = vst [vmem:[%s329 + $0x38] sm:$0xff] %v344
                %v346 = vld [vmem:[%s328 + $0x80] sm:$0xff]
                %347 = vst [vmem:[%s329 + $0x40] sm:$0xff] %v346
                %v348 = vld [vmem:[%s328 + $0x90] sm:$0xff]
                %349 = vst [vmem:[%s329 + $0x48] sm:$0xff] %v348
                %v350 = vld [vmem:[%s328 + $0xa0] sm:$0xff]
                %351 = vst [vmem:[%s329 + $0x50] sm:$0xff] %v350
                %v352 = vld [vmem:[%s328 + $0xb0] sm:$0xff]
                %353 = vst [vmem:[%s329 + $0x58] sm:$0xff] %v352
                %v354 = vld [vmem:[%s328 + $0xc0] sm:$0xff]
                %355 = vst [vmem:[%s329 + $0x60] sm:$0xff] %v354
                %v356 = vld [vmem:[%s328 + $0xd0] sm:$0xff]
                %357 = vst [vmem:[%s329 + $0x68] sm:$0xff] %v356
                %v358 = vld [vmem:[%s328 + $0xe0] sm:$0xff]
                %359 = vst [vmem:[%s329 + $0x70] sm:$0xff] %v358
                %v360 = vld [vmem:[%s328 + $0xf0] sm:$0xff]
                %361 = vst [vmem:[%s329 + $0x78] sm:$0xff] %v360
              $region91: #{sn_bool_vae_forward.1} parent=85 // loop_footer
                %s327 = sadd.s32 1, %s323
              $region92: #{sn_bool_vae_forward.1} parent=85 // loop_footer_branch
                %322 = sbr.rel target = $region88
              $region93: #{sn_bool_vae_forward.1} parent=85 // loop_exit
                _
            $region86: #{sn_bool_vae_forward.1} parent=77 // pred_fallthru
              _
          $region78: #{sn_bool_vae_forward.1} parent=73 // pred_fallthru
            _
          %406 = vnop
        $region74: #{sn_bool_vae_forward.1} parent=31 // pred_fallthru
          _
      $region32: #{sn_bool_vae_forward.1} parent=5 // pred_fallthru
        _
      %p407 = scmp.le.s32.totalorder 1, %s12
      %p408 = scmp.lt.s32.totalorder %s12, 3
      %p409 = pnand %p407, %p408
      %p410 = pneg %p409
      // Predicated region
      $region109: #{sn_bool_vae_forward.1} parent=5 // pred_check
        _
      $region110: #{sn_bool_vae_forward.1} parent=5 // pred_check_branch
        %412 = sbr.rel (%p409) target = $region112
      $region111: #{sn_bool_vae_forward.1} parent=5 // pred_region
        %s413 = ssub.s32 %s12, 1
        %s414 = sand.u32 %s25, 1
        %s415 = sand.u32 %s25, 1
        %s416 = smul.addr %s415, 128
        %s417 = scalar_lea.vmem [#allocation2], %s416
        // Predicated region
        $region113: #{sn_bool_vae_forward.1} parent=111 // pred_check
          %p418 = pneg %p38
        $region114: #{sn_bool_vae_forward.1} parent=111 // pred_check_branch
          %420 = sbr.rel (%p418) target = $region116
        $region115: #{sn_bool_vae_forward.1} parent=111 // pred_region
          _
        $region116: #{sn_bool_vae_forward.1} parent=111 // pred_fallthru
          _
        %s421 = sand.u32 %s51, 1
        %s422 = sand.u32 %s51, 1
        %s423 = smul.addr %s422, 128
        %s424 = scalar_lea.vmem [#allocation3], %s423
        // Predicated region
        $region117: #{sn_bool_vae_forward.1} parent=111 // pred_check
          %p425 = pneg %p64
        $region118: #{sn_bool_vae_forward.1} parent=111 // pred_check_branch
          %427 = sbr.rel (%p425) target = $region120
        $region119: #{sn_bool_vae_forward.1} parent=111 // pred_region
          _
        $region120: #{sn_bool_vae_forward.1} parent=111 // pred_fallthru
          _
        %s428 = sand.u32 %s25, 1
        %s429 = sand.u32 %s25, 1
        %s430 = smul.addr %s429, 128
        %s431 = scalar_lea.vmem [#allocation2], %s430
        %p432 = pneg %p38
        %p433 = pneg %p35
        %s434 = sand.u32 %s51, 1
        %s435 = sand.u32 %s51, 1
        %s436 = smul.addr %s435, 128
        %s437 = scalar_lea.vmem [#allocation3], %s436
        %p438 = pneg %p64
        %p439 = pneg %p61
        %p440 = pneg %p85
        %p441 = pneg %p82
        %p442 = pneg %p106
        %p443 = pneg %p103
        %p444 = pneg %p127
        %p445 = pneg %p124
        %p446 = pneg %p148
        %p447 = pneg %p145
        %p448 = pneg %p174
        %p449 = pneg %p171
        %s450 = sand.u32 %s161, 1
        %s451 = sand.u32 %s161, 1
        %s452 = smul.addr %s451, 320
        %s453 = scalar_lea.vmem [#allocation4], %s452
        %v454 = vld [vmem:[%s2] sm:$0xff]
        %v455 = vld [vmem:[%s2 + $0x8] sm:$0xff]
        %v456 = vld [vmem:[%s2 + $0x10] sm:$0xff]
        %v457 = vld [vmem:[%s2 + $0x18] sm:$0xff]
        %v458 = vld [vmem:[%s2 + $0x20] sm:$0xff]
        %v459 = vld [vmem:[%s2 + $0x28] sm:$0xff]
        %v460 = vld [vmem:[%s2 + $0x30] sm:$0xff]
        %v461 = vld [vmem:[%s2 + $0x38] sm:$0xff]
        %v462 = vld [vmem:[%s2 + $0x40] sm:$0xff]
        %v463 = vld [vmem:[%s2 + $0x48] sm:$0xff]
        %v464 = vld [vmem:[%s2 + $0x50] sm:$0xff]
        %v465 = vld [vmem:[%s2 + $0x58] sm:$0xff]
        %v466 = vld [vmem:[%s2 + $0x60] sm:$0xff]
        %v467 = vld [vmem:[%s2 + $0x68] sm:$0xff]
        %v468 = vld [vmem:[%s2 + $0x70] sm:$0xff]
        %v469 = vld [vmem:[%s2 + $0x78] sm:$0xff]
        %v470 = vld [vmem:[%s2 + $0x80] sm:$0xff]
        %v471 = vld [vmem:[%s2 + $0x88] sm:$0xff]
        %v472 = vld [vmem:[%s2 + $0x90] sm:$0xff]
        %v473 = vld [vmem:[%s2 + $0x98] sm:$0xff]
        %v474 = vld [vmem:[%s2 + $0xa0] sm:$0xff]
        %v475 = vld [vmem:[%s2 + $0xa8] sm:$0xff]
        %v476 = vld [vmem:[%s2 + $0xb0] sm:$0xff]
        %v477 = vld [vmem:[%s2 + $0xb8] sm:$0xff]
        %v478 = vld [vmem:[%s417] sm:$0xff]
        %v479 = vld [vmem:[%s417 + $0x8] sm:$0xff]
        %v480 = vld [vmem:[%s417 + $0x10] sm:$0xff]
        %v481 = vld [vmem:[%s417 + $0x18] sm:$0xff]
        %v482 = vld [vmem:[%s417 + $0x20] sm:$0xff]
        %v483 = vld [vmem:[%s417 + $0x28] sm:$0xff]
        %v484 = vld [vmem:[%s417 + $0x30] sm:$0xff]
        %v485 = vld [vmem:[%s417 + $0x38] sm:$0xff]
        %v486 = vld [vmem:[%s417 + $0x40] sm:$0xff]
        %v487 = vld [vmem:[%s417 + $0x48] sm:$0xff]
        %v488 = vld [vmem:[%s417 + $0x50] sm:$0xff]
        %v489 = vld [vmem:[%s417 + $0x58] sm:$0xff]
        %v490 = vld [vmem:[%s417 + $0x60] sm:$0xff]
        %v491 = vld [vmem:[%s417 + $0x68] sm:$0xff]
        %v492 = vld [vmem:[%s417 + $0x70] sm:$0xff]
        %v493 = vld [vmem:[%s417 + $0x78] sm:$0xff]
        %494 = vmatprep.subr.mxu0 0.0
        %495 = vmatpush1.msra.mxu0 %v478
        %496 = vmatprep.subr.mxu0 0.0
        %497 = vmatpush1.msra.mxu0 %v479
        %498 = vmatprep.subr.mxu0 0.0
        %499 = vmatpush1.msra.mxu0 %v480
        %500 = vmatprep.subr.mxu0 0.0
        %501 = vmatpush1.msra.mxu0 %v481
        %502 = vmatprep.subr.mxu0 0.0
        %503 = vmatpush1.msra.mxu0 %v482
        %504 = vmatprep.subr.mxu0 0.0
        %505 = vmatpush1.msra.mxu0 %v483
        %506 = vmatprep.subr.mxu0 0.0
        %507 = vmatpush1.msra.mxu0 %v484
        %508 = vmatprep.subr.mxu0 0.0
        %509 = vmatpush1.msra.mxu0 %v485
        %510 = vmatprep.subr.mxu0 0.0
        %511 = vmatpush1.msra.mxu0 %v486
        %512 = vmatprep.subr.mxu0 0.0
        %513 = vmatpush1.msra.mxu0 %v487
        %514 = vmatprep.subr.mxu0 0.0
        %515 = vmatpush1.msra.mxu0 %v488
        %516 = vmatprep.subr.mxu0 0.0
        %517 = vmatpush1.msra.mxu0 %v489
        %518 = vmatprep.subr.mxu0 0.0
        %519 = vmatpush1.msra.mxu0 %v490
        %520 = vmatprep.subr.mxu0 0.0
        %521 = vmatpush1.msra.mxu0 %v491
        %522 = vmatprep.subr.mxu0 0.0
        %523 = vmatpush1.msra.mxu0 %v492
        %524 = vmatprep.subr.mxu0 0.0
        %525 = vmatpush1.msra.mxu0 %v493
        %526 = vmatprep.subr.mxu0 0.0
        %527 = vmatpush1.msra.mxu0 0.0
        %528 = vmatprep.subr.mxu0 0.0
        %529 = vmatpush1.msra.mxu0 0.0
        %530 = vmatprep.subr.mxu0 0.0
        %531 = vmatpush1.msra.mxu0 0.0
        %532 = vmatprep.subr.mxu0 0.0
        %533 = vmatpush1.msra.mxu0 0.0
        %534 = vmatprep.subr.mxu0 0.0
        %535 = vmatpush1.msra.mxu0 0.0
        %536 = vmatprep.subr.mxu0 0.0
        %537 = vmatpush1.msra.mxu0 0.0
        %538 = vmatprep.subr.mxu0 0.0
        %539 = vmatpush1.msra.mxu0 0.0
        %540 = vmatprep.subr.mxu0 0.0
        %541 = vmatpush1.msra.mxu0 0.0
        %542 = vmatprep.subr.mxu0 0.0
        %543 = vmatpush1.msra.mxu0 0.0
        %544 = vmatprep.subr.mxu0 0.0
        %545 = vmatpush1.msra.mxu0 0.0
        %546 = vmatprep.subr.mxu0 0.0
        %547 = vmatpush1.msra.mxu0 0.0
        %548 = vmatprep.subr.mxu0 0.0
        %549 = vmatpush1.msra.mxu0 0.0
        %550 = vmatprep.subr.mxu0 0.0
        %551 = vmatpush1.msra.mxu0 0.0
        %552 = vmatprep.subr.mxu0 0.0
        %553 = vmatpush1.msra.mxu0 0.0
        %554 = vmatprep.subr.mxu0 0.0
        %555 = vmatpush1.msra.mxu0 0.0
        %556 = vmatprep.subr.mxu0 0.0
        %557 = vmatpush1.msra.mxu0 0.0
        %558 = vmatprep.mubr.f32.mxu0 0.0
        %559 = vmatmul.mubr.f32.gmra.mrb[0].mxu0 %v454
        %v560 = vpop.f32.mrb[0].mxu0
        %v561 = vadd.f32 0.0, %v560
        %v562 = vpop.f32.mrb[0].mxu0
        %563 = vmatprep.mubr.f32.mxu0 0.0
        %564 = vmatmul.mubr.f32.gmra.mrb[0].mxu0 %v455
        %v565 = vpop.f32.mrb[0].mxu0
        %v566 = vadd.f32 0.0, %v565
        %v567 = vpop.f32.mrb[0].mxu0
        %568 = vmatprep.mubr.f32.mxu0 0.0
        %569 = vmatmul.mubr.f32.gmra.mrb[0].mxu0 %v456
        %v570 = vpop.f32.mrb[0].mxu0
        %v571 = vadd.f32 0.0, %v570
        %v572 = vpop.f32.mrb[0].mxu0
        %573 = vmatprep.mubr.f32.mxu0 0.0
        %574 = vmatmul.mubr.f32.gmra.mrb[0].mxu0 %v457
        %v575 = vpop.f32.mrb[0].mxu0
        %v576 = vadd.f32 0.0, %v575
        %v577 = vpop.f32.mrb[0].mxu0
        %578 = vmatprep.mubr.f32.mxu0 0.0
        %579 = vmatmul.mubr.f32.gmra.mrb[0].mxu0 %v458
        %v580 = vpop.f32.mrb[0].mxu0
        %v581 = vadd.f32 0.0, %v580
        %v582 = vpop.f32.mrb[0].mxu0
        %583 = vmatprep.mubr.f32.mxu0 0.0
        %584 = vmatmul.mubr.f32.gmra.mrb[0].mxu0 %v459
        %v585 = vpop.f32.mrb[0].mxu0
        %v586 = vadd.f32 0.0, %v585
        %v587 = vpop.f32.mrb[0].mxu0
        %588 = vmatprep.mubr.f32.mxu0 0.0
        %589 = vmatmul.mubr.f32.gmra.mrb[0].mxu0 %v460
        %v590 = vpop.f32.mrb[0].mxu0
        %v591 = vadd.f32 0.0, %v590
        %v592 = vpop.f32.mrb[0].mxu0
        %593 = vmatprep.mubr.f32.mxu0 0.0
        %594 = vmatmul.mubr.f32.gmra.mrb[0].mxu0 %v461
        %v595 = vpop.f32.mrb[0].mxu0
        %v596 = vadd.f32 0.0, %v595
        %v597 = vpop.f32.mrb[0].mxu0
        %598 = vmatprep.mubr.f32.mxu0 0.0
        %599 = vmatmul.mubr.f32.gmra.mrb[0].mxu0 %v462
        %v600 = vpop.f32.mrb[0].mxu0
        %v601 = vadd.f32 0.0, %v600
        %v602 = vpop.f32.mrb[0].mxu0
        %603 = vmatprep.mubr.f32.mxu0 0.0
        %604 = vmatmul.mubr.f32.gmra.mrb[0].mxu0 %v463
        %v605 = vpop.f32.mrb[0].mxu0
        %v606 = vadd.f32 0.0, %v605
        %v607 = vpop.f32.mrb[0].mxu0
        %608 = vmatprep.mubr.f32.mxu0 0.0
        %609 = vmatmul.mubr.f32.gmra.mrb[0].mxu0 %v464
        %v610 = vpop.f32.mrb[0].mxu0
        %v611 = vadd.f32 0.0, %v610
        %v612 = vpop.f32.mrb[0].mxu0
        %613 = vmatprep.mubr.f32.mxu0 0.0
        %614 = vmatmul.mubr.f32.gmra.mrb[0].mxu0 %v465
        %v615 = vpop.f32.mrb[0].mxu0
        %v616 = vadd.f32 0.0, %v615
        %v617 = vpop.f32.mrb[0].mxu0
        %618 = vmatprep.mubr.f32.mxu0 0.0
        %619 = vmatmul.mubr.f32.gmra.mrb[0].mxu0 %v466
        %v620 = vpop.f32.mrb[0].mxu0
        %v621 = vadd.f32 0.0, %v620
        %v622 = vpop.f32.mrb[0].mxu0
        %623 = vmatprep.mubr.f32.mxu0 0.0
        %624 = vmatmul.mubr.f32.gmra.mrb[0].mxu0 %v467
        %v625 = vpop.f32.mrb[0].mxu0
        %v626 = vadd.f32 0.0, %v625
        %v627 = vpop.f32.mrb[0].mxu0
        %628 = vmatprep.mubr.f32.mxu0 0.0
        %629 = vmatmul.mubr.f32.gmra.mrb[0].mxu0 %v468
        %v630 = vpop.f32.mrb[0].mxu0
        %v631 = vadd.f32 0.0, %v630
        %v632 = vpop.f32.mrb[0].mxu0
        %633 = vmatprep.mubr.f32.mxu0 0.0
        %634 = vmatmul.mubr.f32.gmra.mrb[0].mxu0 %v469
        %v635 = vpop.f32.mrb[0].mxu0
        %v636 = vadd.f32 0.0, %v635
        %v637 = vpop.f32.mrb[0].mxu0
        %638 = vmatprep.mubr.f32.mxu0 0.0
        %639 = vmatmul.mubr.f32.gmra.mrb[0].mxu0 %v470
        %v640 = vpop.f32.mrb[0].mxu0
        %v641 = vadd.f32 0.0, %v640
        %v642 = vpop.f32.mrb[0].mxu0
        %643 = vmatprep.mubr.f32.mxu0 0.0
        %644 = vmatmul.mubr.f32.gmra.mrb[0].mxu0 %v471
        %v645 = vpop.f32.mrb[0].mxu0
        %v646 = vadd.f32 0.0, %v645
        %v647 = vpop.f32.mrb[0].mxu0
        %648 = vmatprep.mubr.f32.mxu0 0.0
        %649 = vmatmul.mubr.f32.gmra.mrb[0].mxu0 %v472
        %v650 = vpop.f32.mrb[0].mxu0
        %v651 = vadd.f32 0.0, %v650
        %v652 = vpop.f32.mrb[0].mxu0
        %653 = vmatprep.mubr.f32.mxu0 0.0
        %654 = vmatmul.mubr.f32.gmra.mrb[0].mxu0 %v473
        %v655 = vpop.f32.mrb[0].mxu0
        %v656 = vadd.f32 0.0, %v655
        %v657 = vpop.f32.mrb[0].mxu0
        %658 = vmatprep.mubr.f32.mxu0 0.0
        %659 = vmatmul.mubr.f32.gmra.mrb[0].mxu0 %v474
        %v660 = vpop.f32.mrb[0].mxu0
        %v661 = vadd.f32 0.0, %v660
        %v662 = vpop.f32.mrb[0].mxu0
        %663 = vmatprep.mubr.f32.mxu0 0.0
        %664 = vmatmul.mubr.f32.gmra.mrb[0].mxu0 %v475
        %v665 = vpop.f32.mrb[0].mxu0
        %v666 = vadd.f32 0.0, %v665
        %v667 = vpop.f32.mrb[0].mxu0
        %668 = vmatprep.mubr.f32.mxu0 0.0
        %669 = vmatmul.mubr.f32.gmra.mrb[0].mxu0 %v476
        %v670 = vpop.f32.mrb[0].mxu0
        %v671 = vadd.f32 0.0, %v670
        %v672 = vpop.f32.mrb[0].mxu0
        %673 = vmatprep.mubr.f32.mxu0 0.0
        %674 = vmatmul.mubr.f32.gmra.mrb[0].mxu0 %v477
        %v675 = vpop.f32.mrb[0].mxu0
        %v676 = vadd.f32 0.0, %v675
        %v677 = vpop.f32.mrb[0].mxu0
        %678 = vdwg.mxu0
        %v679 = vld [vmem:[%s3] sm:$0xff]
        %v680 = vld [vmem:[%s3 + $0x8] sm:$0xff]
        %v681 = vld [vmem:[%s3 + $0x10] sm:$0xff]
        %v682 = vld [vmem:[%s3 + $0x18] sm:$0xff]
        %v683 = vld [vmem:[%s3 + $0x20] sm:$0xff]
        %v684 = vld [vmem:[%s3 + $0x28] sm:$0xff]
        %v685 = vld [vmem:[%s3 + $0x30] sm:$0xff]
        %v686 = vld [vmem:[%s3 + $0x38] sm:$0xff]
        %v687 = vld [vmem:[%s3 + $0x40] sm:$0xff]
        %v688 = vld [vmem:[%s3 + $0x48] sm:$0xff]
        %v689 = vld [vmem:[%s3 + $0x50] sm:$0xff]
        %v690 = vld [vmem:[%s3 + $0x58] sm:$0xff]
        %v691 = vld [vmem:[%s3 + $0x60] sm:$0xff]
        %v692 = vld [vmem:[%s3 + $0x68] sm:$0xff]
        %v693 = vld [vmem:[%s3 + $0x70] sm:$0xff]
        %v694 = vld [vmem:[%s3 + $0x78] sm:$0xff]
        %v695 = vld [vmem:[%s3 + $0x80] sm:$0xff]
        %v696 = vld [vmem:[%s3 + $0x88] sm:$0xff]
        %v697 = vld [vmem:[%s3 + $0x90] sm:$0xff]
        %v698 = vld [vmem:[%s3 + $0x98] sm:$0xff]
        %v699 = vld [vmem:[%s3 + $0xa0] sm:$0xff]
        %v700 = vld [vmem:[%s3 + $0xa8] sm:$0xff]
        %v701 = vld [vmem:[%s3 + $0xb0] sm:$0xff]
        %v702 = vld [vmem:[%s3 + $0xb8] sm:$0xff]
        %704 = vset.pattern.permute.xlu0 0
        %705 = vperm.xlu0 %704, %v679
        %v706 = vpop.permute.xlu0 %705
        %709 = vset.pattern.permute.xlu0 0
        %710 = vperm.xlu0 %709, %v680
        %v711 = vpop.permute.xlu0 %710
        %714 = vset.pattern.permute.xlu0 0
        %715 = vperm.xlu0 %714, %v681
        %v716 = vpop.permute.xlu0 %715
        %719 = vset.pattern.permute.xlu0 0
        %720 = vperm.xlu0 %719, %v682
        %v721 = vpop.permute.xlu0 %720
        %724 = vset.pattern.permute.xlu0 0
        %725 = vperm.xlu0 %724, %v683
        %v726 = vpop.permute.xlu0 %725
        %729 = vset.pattern.permute.xlu0 0
        %730 = vperm.xlu0 %729, %v684
        %v731 = vpop.permute.xlu0 %730
        %734 = vset.pattern.permute.xlu0 0
        %735 = vperm.xlu0 %734, %v685
        %v736 = vpop.permute.xlu0 %735
        %739 = vset.pattern.permute.xlu0 0
        %740 = vperm.xlu0 %739, %v686
        %v741 = vpop.permute.xlu0 %740
        %744 = vset.pattern.permute.xlu0 0
        %745 = vperm.xlu0 %744, %v687
        %v746 = vpop.permute.xlu0 %745
        %749 = vset.pattern.permute.xlu0 0
        %750 = vperm.xlu0 %749, %v688
        %v751 = vpop.permute.xlu0 %750
        %754 = vset.pattern.permute.xlu0 0
        %755 = vperm.xlu0 %754, %v689
        %v756 = vpop.permute.xlu0 %755
        %759 = vset.pattern.permute.xlu0 0
        %760 = vperm.xlu0 %759, %v690
        %v761 = vpop.permute.xlu0 %760
        %764 = vset.pattern.permute.xlu0 0
        %765 = vperm.xlu0 %764, %v691
        %v766 = vpop.permute.xlu0 %765
        %769 = vset.pattern.permute.xlu0 0
        %770 = vperm.xlu0 %769, %v692
        %v771 = vpop.permute.xlu0 %770
        %774 = vset.pattern.permute.xlu0 0
        %775 = vperm.xlu0 %774, %v693
        %v776 = vpop.permute.xlu0 %775
        %779 = vset.pattern.permute.xlu0 0
        %780 = vperm.xlu0 %779, %v694
        %v781 = vpop.permute.xlu0 %780
        %784 = vset.pattern.permute.xlu0 0
        %785 = vperm.xlu0 %784, %v695
        %v786 = vpop.permute.xlu0 %785
        %789 = vset.pattern.permute.xlu0 0
        %790 = vperm.xlu0 %789, %v696
        %v791 = vpop.permute.xlu0 %790
        %794 = vset.pattern.permute.xlu0 0
        %795 = vperm.xlu0 %794, %v697
        %v796 = vpop.permute.xlu0 %795
        %799 = vset.pattern.permute.xlu0 0
        %800 = vperm.xlu0 %799, %v698
        %v801 = vpop.permute.xlu0 %800
        %804 = vset.pattern.permute.xlu0 0
        %805 = vperm.xlu0 %804, %v699
        %v806 = vpop.permute.xlu0 %805
        %809 = vset.pattern.permute.xlu0 0
        %810 = vperm.xlu0 %809, %v700
        %v811 = vpop.permute.xlu0 %810
        %814 = vset.pattern.permute.xlu0 0
        %815 = vperm.xlu0 %814, %v701
        %v816 = vpop.permute.xlu0 %815
        %819 = vset.pattern.permute.xlu0 0
        %820 = vperm.xlu0 %819, %v702
        %v821 = vpop.permute.xlu0 %820
        %v823 = vadd.f32 %v561, %v706
        %v824 = vadd.f32 %v566, %v711
        %v825 = vadd.f32 %v571, %v716
        %v826 = vadd.f32 %v576, %v721
        %v827 = vadd.f32 %v581, %v726
        %v828 = vadd.f32 %v586, %v731
        %v829 = vadd.f32 %v591, %v736
        %v830 = vadd.f32 %v596, %v741
        %v831 = vadd.f32 %v601, %v746
        %v832 = vadd.f32 %v606, %v751
        %v833 = vadd.f32 %v611, %v756
        %v834 = vadd.f32 %v616, %v761
        %v835 = vadd.f32 %v621, %v766
        %v836 = vadd.f32 %v626, %v771
        %v837 = vadd.f32 %v631, %v776
        %v838 = vadd.f32 %v636, %v781
        %v839 = vadd.f32 %v641, %v786
        %v840 = vadd.f32 %v646, %v791
        %v841 = vadd.f32 %v651, %v796
        %v842 = vadd.f32 %v656, %v801
        %v843 = vadd.f32 %v661, %v806
        %v844 = vadd.f32 %v666, %v811
        %v845 = vadd.f32 %v671, %v816
        %v846 = vadd.f32 %v676, %v821
        %v847 = vld [vmem:[%s424 + $0x8] sm:$0xf]
        %v848 = vld [vmem:[%s424 + $0x18] sm:$0xf]
        %v849 = vld [vmem:[%s424 + $0x28] sm:$0xf]
        %v850 = vld [vmem:[%s424 + $0x38] sm:$0xf]
        %v851 = vld [vmem:[%s424 + $0x48] sm:$0xf]
        %v852 = vld [vmem:[%s424 + $0x58] sm:$0xf]
        %v853 = vld [vmem:[%s424 + $0x68] sm:$0xf]
        %v854 = vld [vmem:[%s424 + $0x78] sm:$0xf]
        %v855 = vadd.f32 %v847, 1e-20
        %v856 = vadd.f32 %v848, 1e-20
        %v857 = vadd.f32 %v849, 1e-20
        %v858 = vadd.f32 %v850, 1e-20
        %v859 = vadd.f32 %v851, 1e-20
        %v860 = vadd.f32 %v852, 1e-20
        %v861 = vadd.f32 %v853, 1e-20
        %v862 = vadd.f32 %v854, 1e-20
        %v863 = vlog2.pop %v855
        %v864 = vmul.f32 %v863, 0.6931472
        %v865 = vlog2.pop %v856
        %v866 = vmul.f32 %v865, 0.6931472
        %v867 = vlog2.pop %v857
        %v868 = vmul.f32 %v867, 0.6931472
        %v869 = vlog2.pop %v858
        %v870 = vmul.f32 %v869, 0.6931472
        %v871 = vlog2.pop %v859
        %v872 = vmul.f32 %v871, 0.6931472
        %v873 = vlog2.pop %v860
        %v874 = vmul.f32 %v873, 0.6931472
        %v875 = vlog2.pop %v861
        %v876 = vmul.f32 %v875, 0.6931472
        %v877 = vlog2.pop %v862
        %v878 = vmul.f32 %v877, 0.6931472
        %v879 = vsub.f32 0.0, %v864
        %v880 = vsub.f32 0.0, %v866
        %v881 = vsub.f32 0.0, %v868
        %v882 = vsub.f32 0.0, %v870
        %v883 = vsub.f32 0.0, %v872
        %v884 = vsub.f32 0.0, %v874
        %v885 = vsub.f32 0.0, %v876
        %v886 = vsub.f32 0.0, %v878
        %v887 = vadd.f32 %v879, 1e-20
        %v888 = vadd.f32 %v880, 1e-20
        %v889 = vadd.f32 %v881, 1e-20
        %v890 = vadd.f32 %v882, 1e-20
        %v891 = vadd.f32 %v883, 1e-20
        %v892 = vadd.f32 %v884, 1e-20
        %v893 = vadd.f32 %v885, 1e-20
        %v894 = vadd.f32 %v886, 1e-20
        %v895 = vlog2.pop %v887
        %v896 = vmul.f32 %v895, 0.6931472
        %v897 = vlog2.pop %v888
        %v898 = vmul.f32 %v897, 0.6931472
        %v899 = vlog2.pop %v889
        %v900 = vmul.f32 %v899, 0.6931472
        %v901 = vlog2.pop %v890
        %v902 = vmul.f32 %v901, 0.6931472
        %v903 = vlog2.pop %v891
        %v904 = vmul.f32 %v903, 0.6931472
        %v905 = vlog2.pop %v892
        %v906 = vmul.f32 %v905, 0.6931472
        %v907 = vlog2.pop %v893
        %v908 = vmul.f32 %v907, 0.6931472
        %v909 = vlog2.pop %v894
        %v910 = vmul.f32 %v909, 0.6931472
        %v911 = vsub.f32 0.0, %v896
        %v912 = vsub.f32 0.0, %v898
        %v913 = vsub.f32 0.0, %v900
        %v914 = vsub.f32 0.0, %v902
        %v915 = vsub.f32 0.0, %v904
        %v916 = vsub.f32 0.0, %v906
        %v917 = vsub.f32 0.0, %v908
        %v918 = vsub.f32 0.0, %v910
        %v919 = vadd.f32 %v823, %v911
        %v920 = vadd.f32 %v826, %v912
        %v921 = vadd.f32 %v829, %v913
        %v922 = vadd.f32 %v832, %v914
        %v923 = vadd.f32 %v835, %v915
        %v924 = vadd.f32 %v838, %v916
        %v925 = vadd.f32 %v841, %v917
        %v926 = vadd.f32 %v844, %v918
        %v927 = vmul.f32 %v919, 2.0
        %v928 = vmul.f32 %v920, 2.0
        %v929 = vmul.f32 %v921, 2.0
        %v930 = vmul.f32 %v922, 2.0
        %v931 = vmul.f32 %v923, 2.0
        %v932 = vmul.f32 %v924, 2.0
        %v933 = vmul.f32 %v925, 2.0
        %v934 = vmul.f32 %v926, 2.0
        %v935 = vmax.f32 %v927, %v928
        %v936 = vmax.f32 %v935, %v929
        %v937 = vmax.f32 %v936, %v930
        %v938 = vmax.f32 %v937, %v931
        %v939 = vmax.f32 %v938, %v932
        %v940 = vmax.f32 %v939, %v933
        %v941 = vmax.f32 %v940, %v934
        %v942 = vsub.f32 %v927, %v941
        %v943 = vsub.f32 %v928, %v941
        %v944 = vsub.f32 %v929, %v941
        %v945 = vsub.f32 %v930, %v941
        %v946 = vsub.f32 %v931, %v941
        %v947 = vsub.f32 %v932, %v941
        %v948 = vsub.f32 %v933, %v941
        %v949 = vsub.f32 %v934, %v941
        %v950 = vmul.f32 %v942, 1.442695
        %v951 = vpow.pop %v950
        %v952 = vmul.f32 %v943, 1.442695
        %v953 = vpow.pop %v952
        %v954 = vmul.f32 %v944, 1.442695
        %v955 = vpow.pop %v954
        %v956 = vmul.f32 %v945, 1.442695
        %v957 = vpow.pop %v956
        %v958 = vmul.f32 %v946, 1.442695
        %v959 = vpow.pop %v958
        %v960 = vmul.f32 %v947, 1.442695
        %v961 = vpow.pop %v960
        %v962 = vmul.f32 %v948, 1.442695
        %v963 = vpow.pop %v962
        %v964 = vmul.f32 %v949, 1.442695
        %v965 = vpow.pop %v964
        %v966 = vadd.f32 %v951, %v953
        %v967 = vadd.f32 %v966, %v955
        %v968 = vadd.f32 %v967, %v957
        %v969 = vadd.f32 %v968, %v959
        %v970 = vadd.f32 %v969, %v961
        %v971 = vadd.f32 %v970, %v963
        %v972 = vadd.f32 %v971, %v965
        %v973 = vrcp.pop %v972
        %v974 = vmul.f32 %v951, %v973
        %v975 = vmul.f32 %v953, %v973
        %v976 = vmul.f32 %v955, %v973
        %v977 = vmul.f32 %v957, %v973
        %v978 = vmul.f32 %v959, %v973
        %v979 = vmul.f32 %v961, %v973
        %v980 = vmul.f32 %v963, %v973
        %v981 = vmul.f32 %v965, %v973
        %v982 = vld [vmem:[%s424] sm:$0xff]
        %v983 = vld [vmem:[%s424 + $0x10] sm:$0xff]
        %v984 = vld [vmem:[%s424 + $0x20] sm:$0xff]
        %v985 = vld [vmem:[%s424 + $0x30] sm:$0xff]
        %v986 = vld [vmem:[%s424 + $0x40] sm:$0xff]
        %v987 = vld [vmem:[%s424 + $0x50] sm:$0xff]
        %v988 = vld [vmem:[%s424 + $0x60] sm:$0xff]
        %v989 = vld [vmem:[%s424 + $0x70] sm:$0xff]
        %v990 = vmul.f32 %v824, 0.5
        %v991 = vmul.f32 %v827, 0.5
        %v992 = vmul.f32 %v830, 0.5
        %v993 = vmul.f32 %v833, 0.5
        %v994 = vmul.f32 %v836, 0.5
        %v995 = vmul.f32 %v839, 0.5
        %v996 = vmul.f32 %v842, 0.5
        %v997 = vmul.f32 %v845, 0.5
        %v998 = vmul.f32 %v990, 1.442695
        %v999 = vpow.pop %v998
        %v1000 = vmul.f32 %v991, 1.442695
        %v1001 = vpow.pop %v1000
        %v1002 = vmul.f32 %v992, 1.442695
        %v1003 = vpow.pop %v1002
        %v1004 = vmul.f32 %v993, 1.442695
        %v1005 = vpow.pop %v1004
        %v1006 = vmul.f32 %v994, 1.442695
        %v1007 = vpow.pop %v1006
        %v1008 = vmul.f32 %v995, 1.442695
        %v1009 = vpow.pop %v1008
        %v1010 = vmul.f32 %v996, 1.442695
        %v1011 = vpow.pop %v1010
        %v1012 = vmul.f32 %v997, 1.442695
        %v1013 = vpow.pop %v1012
        %v1014 = vmul.f32 %v982, %v999
        %v1015 = vmul.f32 %v983, %v1001
        %v1016 = vmul.f32 %v984, %v1003
        %v1017 = vmul.f32 %v985, %v1005
        %v1018 = vmul.f32 %v986, %v1007
        %v1019 = vmul.f32 %v987, %v1009
        %v1020 = vmul.f32 %v988, %v1011
        %v1021 = vmul.f32 %v989, %v1013
        %v1022 = vadd.f32 %v1014, %v825
        %v1023 = vadd.f32 %v1015, %v828
        %v1024 = vadd.f32 %v1016, %v831
        %v1025 = vadd.f32 %v1017, %v834
        %v1026 = vadd.f32 %v1018, %v837
        %v1027 = vadd.f32 %v1019, %v840
        %v1028 = vadd.f32 %v1020, %v843
        %v1029 = vadd.f32 %v1021, %v846
        %vm1030 = vcmask 1043456
        %v1031 = vsel %vm1030, %v974, 0.0
        %v1032 = vsel %vm1030, %v975, 0.0
        %v1033 = vsel %vm1030, %v976, 0.0
        %v1034 = vsel %vm1030, %v977, 0.0
        %v1035 = vsel %vm1030, %v978, 0.0
        %v1036 = vsel %vm1030, %v979, 0.0
        %v1037 = vsel %vm1030, %v980, 0.0
        %v1038 = vsel %vm1030, %v981, 0.0
        %v1039 = vld [vmem:[%s4] sm:$0xff]
        %v1040 = vld [vmem:[%s4 + $0x8] sm:$0xff]
        %v1041 = vld [vmem:[%s4 + $0x10] sm:$0xff]
        %v1042 = vld [vmem:[%s4 + $0x18] sm:$0xff]
        %v1043 = vld [vmem:[%s4 + $0x20] sm:$0xff]
        %v1044 = vld [vmem:[%s4 + $0x28] sm:$0xff]
        %v1045 = vld [vmem:[%s4 + $0x30] sm:$0xff]
        %v1046 = vld [vmem:[%s4 + $0x38] sm:$0xff]
        %v1047 = vld [vmem:[%s4 + $0x40] sm:$0xff]
        %v1048 = vld [vmem:[%s4 + $0x48] sm:$0xff]
        %v1049 = vld [vmem:[%s4 + $0x50] sm:$0xff]
        %v1050 = vld [vmem:[%s4 + $0x58] sm:$0xff]
        %v1051 = vld [vmem:[%s4 + $0x60] sm:$0xff]
        %v1052 = vld [vmem:[%s4 + $0x68] sm:$0xff]
        %v1053 = vld [vmem:[%s4 + $0x70] sm:$0xff]
        %v1054 = vld [vmem:[%s4 + $0x78] sm:$0xff]
        %1055 = vmatprep.subr.mxu0 0.0
        %1056 = vmatpush1.msra.mxu0 %v1031
        %1057 = vmatprep.subr.mxu0 0.0
        %1058 = vmatpush1.msra.mxu0 %v1022
        %1059 = vmatprep.subr.mxu0 0.0
        %1060 = vmatpush1.msra.mxu0 %v1032
        %1061 = vmatprep.subr.mxu0 0.0
        %1062 = vmatpush1.msra.mxu0 %v1023
        %1063 = vmatprep.subr.mxu0 0.0
        %1064 = vmatpush1.msra.mxu0 %v1033
        %1065 = vmatprep.subr.mxu0 0.0
        %1066 = vmatpush1.msra.mxu0 %v1024
        %1067 = vmatprep.subr.mxu0 0.0
        %1068 = vmatpush1.msra.mxu0 %v1034
        %1069 = vmatprep.subr.mxu0 0.0
        %1070 = vmatpush1.msra.mxu0 %v1025
        %1071 = vmatprep.subr.mxu0 0.0
        %1072 = vmatpush1.msra.mxu0 %v1035
        %1073 = vmatprep.subr.mxu0 0.0
        %1074 = vmatpush1.msra.mxu0 %v1026
        %1075 = vmatprep.subr.mxu0 0.0
        %1076 = vmatpush1.msra.mxu0 %v1036
        %1077 = vmatprep.subr.mxu0 0.0
        %1078 = vmatpush1.msra.mxu0 %v1027
        %1079 = vmatprep.subr.mxu0 0.0
        %1080 = vmatpush1.msra.mxu0 %v1037
        %1081 = vmatprep.subr.mxu0 0.0
        %1082 = vmatpush1.msra.mxu0 %v1028
        %1083 = vmatprep.subr.mxu0 0.0
        %1084 = vmatpush1.msra.mxu0 %v1038
        %1085 = vmatprep.subr.mxu0 0.0
        %1086 = vmatpush1.msra.mxu0 %v1029
        %1087 = vmatprep.subr.mxu0 0.0
        %1088 = vmatpush1.msra.mxu0 0.0
        %1089 = vmatprep.subr.mxu0 0.0
        %1090 = vmatpush1.msra.mxu0 0.0
        %1091 = vmatprep.subr.mxu0 0.0
        %1092 = vmatpush1.msra.mxu0 0.0
        %1093 = vmatprep.subr.mxu0 0.0
        %1094 = vmatpush1.msra.mxu0 0.0
        %1095 = vmatprep.subr.mxu0 0.0
        %1096 = vmatpush1.msra.mxu0 0.0
        %1097 = vmatprep.subr.mxu0 0.0
        %1098 = vmatpush1.msra.mxu0 0.0
        %1099 = vmatprep.subr.mxu0 0.0
        %1100 = vmatpush1.msra.mxu0 0.0
        %1101 = vmatprep.subr.mxu0 0.0
        %1102 = vmatpush1.msra.mxu0 0.0
        %1103 = vmatprep.subr.mxu0 0.0
        %1104 = vmatpush1.msra.mxu0 0.0
        %1105 = vmatprep.subr.mxu0 0.0
        %1106 = vmatpush1.msra.mxu0 0.0
        %1107 = vmatprep.subr.mxu0 0.0
        %1108 = vmatpush1.msra.mxu0 0.0
        %1109 = vmatprep.subr.mxu0 0.0
        %1110 = vmatpush1.msra.mxu0 0.0
        %1111 = vmatprep.subr.mxu0 0.0
        %1112 = vmatpush1.msra.mxu0 0.0
        %1113 = vmatprep.subr.mxu0 0.0
        %1114 = vmatpush1.msra.mxu0 0.0
        %1115 = vmatprep.subr.mxu0 0.0
        %1116 = vmatpush1.msra.mxu0 0.0
        %1117 = vmatprep.subr.mxu0 0.0
        %1118 = vmatpush1.msra.mxu0 0.0
        %1119 = vmatprep.mubr.f32.mxu0 0.0
        %1120 = vmatmul.mubr.f32.gmra.mrb[0].mxu0 %v1039
        %v1121 = vpop.f32.mrb[0].mxu0
        %v1122 = vadd.f32 0.0, %v1121
        %v1123 = vpop.f32.mrb[0].mxu0
        %1124 = vmatprep.mubr.f32.mxu0 0.0
        %1125 = vmatmul.mubr.f32.gmra.mrb[0].mxu0 %v1040
        %v1126 = vpop.f32.mrb[0].mxu0
        %v1127 = vadd.f32 0.0, %v1126
        %v1128 = vpop.f32.mrb[0].mxu0
        %1129 = vmatprep.mubr.f32.mxu0 0.0
        %1130 = vmatmul.mubr.f32.gmra.mrb[0].mxu0 %v1041
        %v1131 = vpop.f32.mrb[0].mxu0
        %v1132 = vadd.f32 0.0, %v1131
        %v1133 = vpop.f32.mrb[0].mxu0
        %1134 = vmatprep.mubr.f32.mxu0 0.0
        %1135 = vmatmul.mubr.f32.gmra.mrb[0].mxu0 %v1042
        %v1136 = vpop.f32.mrb[0].mxu0
        %v1137 = vadd.f32 0.0, %v1136
        %v1138 = vpop.f32.mrb[0].mxu0
        %1139 = vmatprep.mubr.f32.mxu0 0.0
        %1140 = vmatmul.mubr.f32.gmra.mrb[0].mxu0 %v1043
        %v1141 = vpop.f32.mrb[0].mxu0
        %v1142 = vadd.f32 0.0, %v1141
        %v1143 = vpop.f32.mrb[0].mxu0
        %1144 = vmatprep.mubr.f32.mxu0 0.0
        %1145 = vmatmul.mubr.f32.gmra.mrb[0].mxu0 %v1044
        %v1146 = vpop.f32.mrb[0].mxu0
        %v1147 = vadd.f32 0.0, %v1146
        %v1148 = vpop.f32.mrb[0].mxu0
        %1149 = vmatprep.mubr.f32.mxu0 0.0
        %1150 = vmatmul.mubr.f32.gmra.mrb[0].mxu0 %v1045
        %v1151 = vpop.f32.mrb[0].mxu0
        %v1152 = vadd.f32 0.0, %v1151
        %v1153 = vpop.f32.mrb[0].mxu0
        %1154 = vmatprep.mubr.f32.mxu0 0.0
        %1155 = vmatmul.mubr.f32.gmra.mrb[0].mxu0 %v1046
        %v1156 = vpop.f32.mrb[0].mxu0
        %v1157 = vadd.f32 0.0, %v1156
        %v1158 = vpop.f32.mrb[0].mxu0
        %1159 = vmatprep.mubr.f32.mxu0 0.0
        %1160 = vmatmul.mubr.f32.gmra.mrb[0].mxu0 %v1047
        %v1161 = vpop.f32.mrb[0].mxu0
        %v1162 = vadd.f32 0.0, %v1161
        %v1163 = vpop.f32.mrb[0].mxu0
        %1164 = vmatprep.mubr.f32.mxu0 0.0
        %1165 = vmatmul.mubr.f32.gmra.mrb[0].mxu0 %v1048
        %v1166 = vpop.f32.mrb[0].mxu0
        %v1167 = vadd.f32 0.0, %v1166
        %v1168 = vpop.f32.mrb[0].mxu0
        %1169 = vmatprep.mubr.f32.mxu0 0.0
        %1170 = vmatmul.mubr.f32.gmra.mrb[0].mxu0 %v1049
        %v1171 = vpop.f32.mrb[0].mxu0
        %v1172 = vadd.f32 0.0, %v1171
        %v1173 = vpop.f32.mrb[0].mxu0
        %1174 = vmatprep.mubr.f32.mxu0 0.0
        %1175 = vmatmul.mubr.f32.gmra.mrb[0].mxu0 %v1050
        %v1176 = vpop.f32.mrb[0].mxu0
        %v1177 = vadd.f32 0.0, %v1176
        %v1178 = vpop.f32.mrb[0].mxu0
        %1179 = vmatprep.mubr.f32.mxu0 0.0
        %1180 = vmatmul.mubr.f32.gmra.mrb[0].mxu0 %v1051
        %v1181 = vpop.f32.mrb[0].mxu0
        %v1182 = vadd.f32 0.0, %v1181
        %v1183 = vpop.f32.mrb[0].mxu0
        %1184 = vmatprep.mubr.f32.mxu0 0.0
        %1185 = vmatmul.mubr.f32.gmra.mrb[0].mxu0 %v1052
        %v1186 = vpop.f32.mrb[0].mxu0
        %v1187 = vadd.f32 0.0, %v1186
        %v1188 = vpop.f32.mrb[0].mxu0
        %1189 = vmatprep.mubr.f32.mxu0 0.0
        %1190 = vmatmul.mubr.f32.gmra.mrb[0].mxu0 %v1053
        %v1191 = vpop.f32.mrb[0].mxu0
        %v1192 = vadd.f32 0.0, %v1191
        %v1193 = vpop.f32.mrb[0].mxu0
        %1194 = vmatprep.mubr.f32.mxu0 0.0
        %1195 = vmatmul.mubr.f32.gmra.mrb[0].mxu0 %v1054
        %v1196 = vpop.f32.mrb[0].mxu0
        %v1197 = vadd.f32 0.0, %v1196
        %v1198 = vpop.f32.mrb[0].mxu0
        %1199 = vdwg.mxu0
        %v1200 = vld [vmem:[%s5] sm:$0xff]
        %v1201 = vld [vmem:[%s5 + $0x8] sm:$0xff]
        %v1202 = vld [vmem:[%s5 + $0x10] sm:$0xff]
        %v1203 = vld [vmem:[%s5 + $0x18] sm:$0xff]
        %v1204 = vld [vmem:[%s5 + $0x20] sm:$0xff]
        %v1205 = vld [vmem:[%s5 + $0x28] sm:$0xff]
        %v1206 = vld [vmem:[%s5 + $0x30] sm:$0xff]
        %v1207 = vld [vmem:[%s5 + $0x38] sm:$0xff]
        %v1208 = vld [vmem:[%s5 + $0x40] sm:$0xff]
        %v1209 = vld [vmem:[%s5 + $0x48] sm:$0xff]
        %v1210 = vld [vmem:[%s5 + $0x50] sm:$0xff]
        %v1211 = vld [vmem:[%s5 + $0x58] sm:$0xff]
        %v1212 = vld [vmem:[%s5 + $0x60] sm:$0xff]
        %v1213 = vld [vmem:[%s5 + $0x68] sm:$0xff]
        %v1214 = vld [vmem:[%s5 + $0x70] sm:$0xff]
        %v1215 = vld [vmem:[%s5 + $0x78] sm:$0xff]
        %1217 = vset.pattern.permute.xlu0 0
        %1218 = vperm.xlu0 %1217, %v1200
        %v1219 = vpop.permute.xlu0 %1218
        %1222 = vset.pattern.permute.xlu0 0
        %1223 = vperm.xlu0 %1222, %v1201
        %v1224 = vpop.permute.xlu0 %1223
        %1227 = vset.pattern.permute.xlu0 0
        %1228 = vperm.xlu0 %1227, %v1202
        %v1229 = vpop.permute.xlu0 %1228
        %1232 = vset.pattern.permute.xlu0 0
        %1233 = vperm.xlu0 %1232, %v1203
        %v1234 = vpop.permute.xlu0 %1233
        %1237 = vset.pattern.permute.xlu0 0
        %1238 = vperm.xlu0 %1237, %v1204
        %v1239 = vpop.permute.xlu0 %1238
        %1242 = vset.pattern.permute.xlu0 0
        %1243 = vperm.xlu0 %1242, %v1205
        %v1244 = vpop.permute.xlu0 %1243
        %1247 = vset.pattern.permute.xlu0 0
        %1248 = vperm.xlu0 %1247, %v1206
        %v1249 = vpop.permute.xlu0 %1248
        %1252 = vset.pattern.permute.xlu0 0
        %1253 = vperm.xlu0 %1252, %v1207
        %v1254 = vpop.permute.xlu0 %1253
        %1257 = vset.pattern.permute.xlu0 0
        %1258 = vperm.xlu0 %1257, %v1208
        %v1259 = vpop.permute.xlu0 %1258
        %1262 = vset.pattern.permute.xlu0 0
        %1263 = vperm.xlu0 %1262, %v1209
        %v1264 = vpop.permute.xlu0 %1263
        %1267 = vset.pattern.permute.xlu0 0
        %1268 = vperm.xlu0 %1267, %v1210
        %v1269 = vpop.permute.xlu0 %1268
        %1272 = vset.pattern.permute.xlu0 0
        %1273 = vperm.xlu0 %1272, %v1211
        %v1274 = vpop.permute.xlu0 %1273
        %1277 = vset.pattern.permute.xlu0 0
        %1278 = vperm.xlu0 %1277, %v1212
        %v1279 = vpop.permute.xlu0 %1278
        %1282 = vset.pattern.permute.xlu0 0
        %1283 = vperm.xlu0 %1282, %v1213
        %v1284 = vpop.permute.xlu0 %1283
        %1287 = vset.pattern.permute.xlu0 0
        %1288 = vperm.xlu0 %1287, %v1214
        %v1289 = vpop.permute.xlu0 %1288
        %1292 = vset.pattern.permute.xlu0 0
        %1293 = vperm.xlu0 %1292, %v1215
        %v1294 = vpop.permute.xlu0 %1293
        %v1296 = vadd.f32 %v1122, %v1219
        %v1297 = vadd.f32 %v1127, %v1224
        %v1298 = vadd.f32 %v1132, %v1229
        %v1299 = vadd.f32 %v1137, %v1234
        %v1300 = vadd.f32 %v1142, %v1239
        %v1301 = vadd.f32 %v1147, %v1244
        %v1302 = vadd.f32 %v1152, %v1249
        %v1303 = vadd.f32 %v1157, %v1254
        %v1304 = vadd.f32 %v1162, %v1259
        %v1305 = vadd.f32 %v1167, %v1264
        %v1306 = vadd.f32 %v1172, %v1269
        %v1307 = vadd.f32 %v1177, %v1274
        %v1308 = vadd.f32 %v1182, %v1279
        %v1309 = vadd.f32 %v1187, %v1284
        %v1310 = vadd.f32 %v1192, %v1289
        %v1311 = vadd.f32 %v1197, %v1294
        %v1312 = vmax.f32 %v823, %v826
        %v1313 = vmax.f32 %v1312, %v829
        %v1314 = vmax.f32 %v1313, %v832
        %v1315 = vmax.f32 %v1314, %v835
        %v1316 = vmax.f32 %v1315, %v838
        %v1317 = vmax.f32 %v1316, %v841
        %v1318 = vmax.f32 %v1317, %v844
        %v1319 = vsub.f32 %v823, %v1318
        %v1320 = vsub.f32 %v826, %v1318
        %v1321 = vsub.f32 %v829, %v1318
        %v1322 = vsub.f32 %v832, %v1318
        %v1323 = vsub.f32 %v835, %v1318
        %v1324 = vsub.f32 %v838, %v1318
        %v1325 = vsub.f32 %v841, %v1318
        %v1326 = vsub.f32 %v844, %v1318
        %v1327 = vmul.f32 %v1319, 1.442695
        %v1328 = vpow.pop %v1327
        %v1329 = vmul.f32 %v1320, 1.442695
        %v1330 = vpow.pop %v1329
        %v1331 = vmul.f32 %v1321, 1.442695
        %v1332 = vpow.pop %v1331
        %v1333 = vmul.f32 %v1322, 1.442695
        %v1334 = vpow.pop %v1333
        %v1335 = vmul.f32 %v1323, 1.442695
        %v1336 = vpow.pop %v1335
        %v1337 = vmul.f32 %v1324, 1.442695
        %v1338 = vpow.pop %v1337
        %v1339 = vmul.f32 %v1325, 1.442695
        %v1340 = vpow.pop %v1339
        %v1341 = vmul.f32 %v1326, 1.442695
        %v1342 = vpow.pop %v1341
        %v1343 = vadd.f32 %v1328, %v1330
        %v1344 = vadd.f32 %v1343, %v1332
        %v1345 = vadd.f32 %v1344, %v1334
        %v1346 = vadd.f32 %v1345, %v1336
        %v1347 = vadd.f32 %v1346, %v1338
        %v1348 = vadd.f32 %v1347, %v1340
        %v1349 = vadd.f32 %v1348, %v1342
        %v1350 = vrcp.pop %v1349
        %v1351 = vmul.f32 %v1328, %v1350
        %v1352 = vmul.f32 %v1330, %v1350
        %v1353 = vmul.f32 %v1332, %v1350
        %v1354 = vmul.f32 %v1334, %v1350
        %v1355 = vmul.f32 %v1336, %v1350
        %v1356 = vmul.f32 %v1338, %v1350
        %v1357 = vmul.f32 %v1340, %v1350
        %v1358 = vmul.f32 %v1342, %v1350
        %1359 = vst [vmem:[%s453] sm:$0xff] %v1296
        %1360 = vst [vmem:[%s453 + $0x8] sm:$0xff] %v1297
        %1361 = vst [vmem:[%s453 + $0x28] sm:$0xff] %v1298
        %1362 = vst [vmem:[%s453 + $0x30] sm:$0xff] %v1299
        %1363 = vst [vmem:[%s453 + $0x50] sm:$0xff] %v1300
        %1364 = vst [vmem:[%s453 + $0x58] sm:$0xff] %v1301
        %1365 = vst [vmem:[%s453 + $0x78] sm:$0xff] %v1302
        %1366 = vst [vmem:[%s453 + $0x80] sm:$0xff] %v1303
        %1367 = vst [vmem:[%s453 + $0xa0] sm:$0xff] %v1304
        %1368 = vst [vmem:[%s453 + $0xa8] sm:$0xff] %v1305
        %1369 = vst [vmem:[%s453 + $0xc8] sm:$0xff] %v1306
        %1370 = vst [vmem:[%s453 + $0xd0] sm:$0xff] %v1307
        %1371 = vst [vmem:[%s453 + $0xf0] sm:$0xff] %v1308
        %1372 = vst [vmem:[%s453 + $0xf8] sm:$0xff] %v1309
        %1373 = vst [vmem:[%s453 + $0x118] sm:$0xff] %v1310
        %1374 = vst [vmem:[%s453 + $0x120] sm:$0xff] %v1311
        %1375 = vst [vmem:[%s453 + $0x10] sm:$0xff] %v825
        %1376 = vst [vmem:[%s453 + $0x38] sm:$0xff] %v828
        %1377 = vst [vmem:[%s453 + $0x60] sm:$0xff] %v831
        %1378 = vst [vmem:[%s453 + $0x88] sm:$0xff] %v834
        %1379 = vst [vmem:[%s453 + $0xb0] sm:$0xff] %v837
        %1380 = vst [vmem:[%s453 + $0xd8] sm:$0xff] %v840
        %1381 = vst [vmem:[%s453 + $0x100] sm:$0xff] %v843
        %1382 = vst [vmem:[%s453 + $0x128] sm:$0xff] %v846
        %1383 = vst [vmem:[%s453 + $0x18] sm:$0xff] %v824
        %1384 = vst [vmem:[%s453 + $0x40] sm:$0xff] %v827
        %1385 = vst [vmem:[%s453 + $0x68] sm:$0xff] %v830
        %1386 = vst [vmem:[%s453 + $0x90] sm:$0xff] %v833
        %1387 = vst [vmem:[%s453 + $0xb8] sm:$0xff] %v836
        %1388 = vst [vmem:[%s453 + $0xe0] sm:$0xff] %v839
        %1389 = vst [vmem:[%s453 + $0x108] sm:$0xff] %v842
        %1390 = vst [vmem:[%s453 + $0x130] sm:$0xff] %v845
        %1391 = vst [vmem:[%s453 + $0x20] sm:$0xf] %v1351
        %1392 = vst [vmem:[%s453 + $0x48] sm:$0xf] %v1352
        %1393 = vst [vmem:[%s453 + $0x70] sm:$0xf] %v1353
        %1394 = vst [vmem:[%s453 + $0x98] sm:$0xf] %v1354
        %1395 = vst [vmem:[%s453 + $0xc0] sm:$0xf] %v1355
        %1396 = vst [vmem:[%s453 + $0xe8] sm:$0xf] %v1356
        %1397 = vst [vmem:[%s453 + $0x110] sm:$0xf] %v1357
        %1398 = vst [vmem:[%s453 + $0x138] sm:$0xf] %v1358
        %s1399 = sand.u32 %s161, 1
        %s1400 = sand.u32 %s161, 1
        %s1401 = smul.addr %s1400, 320
        %s1402 = scalar_lea.vmem [#allocation4], %s1401
        // Predicated region
        $region121: #{sn_bool_vae_forward.1} parent=111 // pred_check
          %p1403 = pneg %p171
        $region122: #{sn_bool_vae_forward.1} parent=111 // pred_check_branch
          %1405 = sbr.rel (%p1403) target = $region124
        $region123: #{sn_bool_vae_forward.1} parent=111 // pred_region
          %s1406 = smul.addr %s17, 8
          %s1407 = scalar_lea.vmem %s6, %s1406
          // Predicated region
          $region125: #{sn_bool_vae_forward.1} parent=123 // pred_check
            _
          $region126: #{sn_bool_vae_forward.1} parent=123 // pred_check_branch
            %1409 = sbr.rel (0) target = $region128
          $region127: #{sn_bool_vae_forward.1} parent=123 // pred_region
            // Predicated region
            $region129: #{sn_bool_vae_forward.1} parent=127 // pred_check
              _
            $region130: #{sn_bool_vae_forward.1} parent=127 // pred_check_branch
              %1411 = sbr.rel (0) target = $region132
            $region131: #{sn_bool_vae_forward.1} parent=127 // pred_region
              // Predicated region
              $region144: #{sn_bool_vae_forward.1} parent=131 // pred_check
                _
              $region145: #{sn_bool_vae_forward.1} parent=131 // pred_check_branch
                %1504 = sbr.rel (0) target = $region147
              $region146: #{sn_bool_vae_forward.1} parent=131 // pred_region
                loop: start=0, step=1, limit=1
                $region148: #{sn_bool_vae_forward.1} parent=146 // loop_pre_header
                  _
                $region149: #{sn_bool_vae_forward.1} parent=146 // loop_header
                  %s1506 = sphi 0, %s1510
                  %p1507 = scmp.ge.s32.totalorder %s1506, 1
                  %s1511 = sphi %s1402, %s1402
                  %s1512 = sphi %s1407, %s1407
                $region150: #{sn_bool_vae_forward.1} parent=146 // loop_header_branch
                  %1509 = sbr.rel (%p1507) target = $region154
                $region151: #{sn_bool_vae_forward.1} parent=146 // loop_body
                  %v1513 = vld [vmem:[%s1511] sm:$0xff]
                  %1514 = vst [vmem:[%s1512] sm:$0xff] %v1513
                  %v1515 = vld [vmem:[%s1511 + $0x8] sm:$0xff]
                  %1516 = vst [vmem:[%s1512 + $0x10] sm:$0xff] %v1515
                  %v1517 = vld [vmem:[%s1511 + $0x10] sm:$0xff]
                  %1518 = vst [vmem:[%s1512 + $0x20] sm:$0xff] %v1517
                  %v1519 = vld [vmem:[%s1511 + $0x18] sm:$0xff]
                  %1520 = vst [vmem:[%s1512 + $0x30] sm:$0xff] %v1519
                  %v1521 = vld [vmem:[%s1511 + $0x20] sm:$0xff]
                  %1522 = vst [vmem:[%s1512 + $0x40] sm:$0xff] %v1521
                  %v1523 = vld [vmem:[%s1511 + $0x28] sm:$0xff]
                  %1524 = vst [vmem:[%s1512 + $0x50] sm:$0xff] %v1523
                  %v1525 = vld [vmem:[%s1511 + $0x30] sm:$0xff]
                  %1526 = vst [vmem:[%s1512 + $0x60] sm:$0xff] %v1525
                  %v1527 = vld [vmem:[%s1511 + $0x38] sm:$0xff]
                  %1528 = vst [vmem:[%s1512 + $0x70] sm:$0xff] %v1527
                  %v1529 = vld [vmem:[%s1511 + $0x40] sm:$0xff]
                  %1530 = vst [vmem:[%s1512 + $0x80] sm:$0xff] %v1529
                  %v1531 = vld [vmem:[%s1511 + $0x48] sm:$0xff]
                  %1532 = vst [vmem:[%s1512 + $0x90] sm:$0xff] %v1531
                  %v1533 = vld [vmem:[%s1511 + $0x50] sm:$0xff]
                  %1534 = vst [vmem:[%s1512 + $0xa0] sm:$0xff] %v1533
                  %v1535 = vld [vmem:[%s1511 + $0x58] sm:$0xff]
                  %1536 = vst [vmem:[%s1512 + $0xb0] sm:$0xff] %v1535
                  %v1537 = vld [vmem:[%s1511 + $0x60] sm:$0xff]
                  %1538 = vst [vmem:[%s1512 + $0xc0] sm:$0xff] %v1537
                  %v1539 = vld [vmem:[%s1511 + $0x68] sm:$0xff]
                  %1540 = vst [vmem:[%s1512 + $0xd0] sm:$0xff] %v1539
                  %v1541 = vld [vmem:[%s1511 + $0x70] sm:$0xff]
                  %1542 = vst [vmem:[%s1512 + $0xe0] sm:$0xff] %v1541
                  %v1543 = vld [vmem:[%s1511 + $0x78] sm:$0xff]
                  %1544 = vst [vmem:[%s1512 + $0xf0] sm:$0xff] %v1543
                  %v1545 = vld [vmem:[%s1511 + $0x80] sm:$0xff]
                  %1546 = vst [vmem:[%s1512 + $0x100] sm:$0xff] %v1545
                  %v1547 = vld [vmem:[%s1511 + $0x88] sm:$0xff]
                  %1548 = vst [vmem:[%s1512 + $0x110] sm:$0xff] %v1547
                  %v1549 = vld [vmem:[%s1511 + $0x90] sm:$0xff]
                  %1550 = vst [vmem:[%s1512 + $0x120] sm:$0xff] %v1549
                  %v1551 = vld [vmem:[%s1511 + $0x98] sm:$0xff]
                  %1552 = vst [vmem:[%s1512 + $0x130] sm:$0xff] %v1551
                  %v1553 = vld [vmem:[%s1511 + $0xa0] sm:$0xff]
                  %1554 = vst [vmem:[%s1512 + $0x140] sm:$0xff] %v1553
                  %v1555 = vld [vmem:[%s1511 + $0xa8] sm:$0xff]
                  %1556 = vst [vmem:[%s1512 + $0x150] sm:$0xff] %v1555
                  %v1557 = vld [vmem:[%s1511 + $0xb0] sm:$0xff]
                  %1558 = vst [vmem:[%s1512 + $0x160] sm:$0xff] %v1557
                  %v1559 = vld [vmem:[%s1511 + $0xb8] sm:$0xff]
                  %1560 = vst [vmem:[%s1512 + $0x170] sm:$0xff] %v1559
                  %v1561 = vld [vmem:[%s1511 + $0xc0] sm:$0xff]
                  %1562 = vst [vmem:[%s1512 + $0x180] sm:$0xff] %v1561
                  %v1563 = vld [vmem:[%s1511 + $0xc8] sm:$0xff]
                  %1564 = vst [vmem:[%s1512 + $0x190] sm:$0xff] %v1563
                  %v1565 = vld [vmem:[%s1511 + $0xd0] sm:$0xff]
                  %1566 = vst [vmem:[%s1512 + $0x1a0] sm:$0xff] %v1565
                  %v1567 = vld [vmem:[%s1511 + $0xd8] sm:$0xff]
                  %1568 = vst [vmem:[%s1512 + $0x1b0] sm:$0xff] %v1567
                  %v1569 = vld [vmem:[%s1511 + $0xe0] sm:$0xff]
                  %1570 = vst [vmem:[%s1512 + $0x1c0] sm:$0xff] %v1569
                  %v1571 = vld [vmem:[%s1511 + $0xe8] sm:$0xff]
                  %1572 = vst [vmem:[%s1512 + $0x1d0] sm:$0xff] %v1571
                  %v1573 = vld [vmem:[%s1511 + $0xf0] sm:$0xff]
                  %1574 = vst [vmem:[%s1512 + $0x1e0] sm:$0xff] %v1573
                  %v1575 = vld [vmem:[%s1511 + $0xf8] sm:$0xff]
                  %1576 = vst [vmem:[%s1512 + $0x1f0] sm:$0xff] %v1575
                  %v1577 = vld [vmem:[%s1511 + $0x100] sm:$0xff]
                  %1578 = vst [vmem:[%s1512 + $0x200] sm:$0xff] %v1577
                  %v1579 = vld [vmem:[%s1511 + $0x108] sm:$0xff]
                  %1580 = vst [vmem:[%s1512 + $0x210] sm:$0xff] %v1579
                  %v1581 = vld [vmem:[%s1511 + $0x110] sm:$0xff]
                  %1582 = vst [vmem:[%s1512 + $0x220] sm:$0xff] %v1581
                  %v1583 = vld [vmem:[%s1511 + $0x118] sm:$0xff]
                  %1584 = vst [vmem:[%s1512 + $0x230] sm:$0xff] %v1583
                  %v1585 = vld [vmem:[%s1511 + $0x120] sm:$0xff]
                  %1586 = vst [vmem:[%s1512 + $0x240] sm:$0xff] %v1585
                  %v1587 = vld [vmem:[%s1511 + $0x128] sm:$0xff]
                  %1588 = vst [vmem:[%s1512 + $0x250] sm:$0xff] %v1587
                  %v1589 = vld [vmem:[%s1511 + $0x130] sm:$0xff]
                  %1590 = vst [vmem:[%s1512 + $0x260] sm:$0xff] %v1589
                  %v1591 = vld [vmem:[%s1511 + $0x138] sm:$0xff]
                  %1592 = vst [vmem:[%s1512 + $0x270] sm:$0xff] %v1591
                $region152: #{sn_bool_vae_forward.1} parent=146 // loop_footer
                  %s1510 = sadd.s32 1, %s1506
                $region153: #{sn_bool_vae_forward.1} parent=146 // loop_footer_branch
                  %1505 = sbr.rel target = $region149
                $region154: #{sn_bool_vae_forward.1} parent=146 // loop_exit
                  _
              $region147: #{sn_bool_vae_forward.1} parent=131 // pred_fallthru
                _
              // Predicated region
              $region155: #{sn_bool_vae_forward.1} parent=131 // pred_check
                _
              $region156: #{sn_bool_vae_forward.1} parent=131 // pred_check_branch
                %1594 = sbr.rel target = $region158
              $region157: #{sn_bool_vae_forward.1} parent=131 // pred_region
                _
              $region158: #{sn_bool_vae_forward.1} parent=131 // pred_fallthru
                _
            $region132: #{sn_bool_vae_forward.1} parent=127 // pred_fallthru
              _
            // Predicated region
            $region133: #{sn_bool_vae_forward.1} parent=127 // pred_check
              _
            $region134: #{sn_bool_vae_forward.1} parent=127 // pred_check_branch
              %1413 = sbr.rel target = $region136
            $region135: #{sn_bool_vae_forward.1} parent=127 // pred_region
              loop: start=0, step=1, limit=1
              $region137: #{sn_bool_vae_forward.1} parent=135 // loop_pre_header
                _
              $region138: #{sn_bool_vae_forward.1} parent=135 // loop_header
                %s1416 = sphi 0, %s1420
                %p1417 = scmp.ge.s32.totalorder %s1416, 1
                %s1421 = sphi %s1402, %s1402
                %s1422 = sphi %s1407, %s1407
              $region139: #{sn_bool_vae_forward.1} parent=135 // loop_header_branch
                %1419 = sbr.rel (%p1417) target = $region143
              $region140: #{sn_bool_vae_forward.1} parent=135 // loop_body
                %v1423 = vld [vmem:[%s1421] sm:$0xff]
                %1424 = vst [vmem:[%s1422] sm:$0xff] %v1423
                %v1425 = vld [vmem:[%s1421 + $0x8] sm:$0xff]
                %1426 = vst [vmem:[%s1422 + $0x10] sm:$0xff] %v1425
                %v1427 = vld [vmem:[%s1421 + $0x10] sm:$0xff]
                %1428 = vst [vmem:[%s1422 + $0x20] sm:$0xff] %v1427
                %v1429 = vld [vmem:[%s1421 + $0x18] sm:$0xff]
                %1430 = vst [vmem:[%s1422 + $0x30] sm:$0xff] %v1429
                %v1431 = vld [vmem:[%s1421 + $0x20] sm:$0xff]
                %1432 = vst [vmem:[%s1422 + $0x40] sm:$0xff] %v1431
                %v1433 = vld [vmem:[%s1421 + $0x28] sm:$0xff]
                %1434 = vst [vmem:[%s1422 + $0x50] sm:$0xff] %v1433
                %v1435 = vld [vmem:[%s1421 + $0x30] sm:$0xff]
                %1436 = vst [vmem:[%s1422 + $0x60] sm:$0xff] %v1435
                %v1437 = vld [vmem:[%s1421 + $0x38] sm:$0xff]
                %1438 = vst [vmem:[%s1422 + $0x70] sm:$0xff] %v1437
                %v1439 = vld [vmem:[%s1421 + $0x40] sm:$0xff]
                %1440 = vst [vmem:[%s1422 + $0x80] sm:$0xff] %v1439
                %v1441 = vld [vmem:[%s1421 + $0x48] sm:$0xff]
                %1442 = vst [vmem:[%s1422 + $0x90] sm:$0xff] %v1441
                %v1443 = vld [vmem:[%s1421 + $0x50] sm:$0xff]
                %1444 = vst [vmem:[%s1422 + $0xa0] sm:$0xff] %v1443
                %v1445 = vld [vmem:[%s1421 + $0x58] sm:$0xff]
                %1446 = vst [vmem:[%s1422 + $0xb0] sm:$0xff] %v1445
                %v1447 = vld [vmem:[%s1421 + $0x60] sm:$0xff]
                %1448 = vst [vmem:[%s1422 + $0xc0] sm:$0xff] %v1447
                %v1449 = vld [vmem:[%s1421 + $0x68] sm:$0xff]
                %1450 = vst [vmem:[%s1422 + $0xd0] sm:$0xff] %v1449
                %v1451 = vld [vmem:[%s1421 + $0x70] sm:$0xff]
                %1452 = vst [vmem:[%s1422 + $0xe0] sm:$0xff] %v1451
                %v1453 = vld [vmem:[%s1421 + $0x78] sm:$0xff]
                %1454 = vst [vmem:[%s1422 + $0xf0] sm:$0xff] %v1453
                %v1455 = vld [vmem:[%s1421 + $0x80] sm:$0xff]
                %1456 = vst [vmem:[%s1422 + $0x100] sm:$0xff] %v1455
                %v1457 = vld [vmem:[%s1421 + $0x88] sm:$0xff]
                %1458 = vst [vmem:[%s1422 + $0x110] sm:$0xff] %v1457
                %v1459 = vld [vmem:[%s1421 + $0x90] sm:$0xff]
                %1460 = vst [vmem:[%s1422 + $0x120] sm:$0xff] %v1459
                %v1461 = vld [vmem:[%s1421 + $0x98] sm:$0xff]
                %1462 = vst [vmem:[%s1422 + $0x130] sm:$0xff] %v1461
                %v1463 = vld [vmem:[%s1421 + $0xa0] sm:$0xff]
                %1464 = vst [vmem:[%s1422 + $0x140] sm:$0xff] %v1463
                %v1465 = vld [vmem:[%s1421 + $0xa8] sm:$0xff]
                %1466 = vst [vmem:[%s1422 + $0x150] sm:$0xff] %v1465
                %v1467 = vld [vmem:[%s1421 + $0xb0] sm:$0xff]
                %1468 = vst [vmem:[%s1422 + $0x160] sm:$0xff] %v1467
                %v1469 = vld [vmem:[%s1421 + $0xb8] sm:$0xff]
                %1470 = vst [vmem:[%s1422 + $0x170] sm:$0xff] %v1469
                %v1471 = vld [vmem:[%s1421 + $0xc0] sm:$0xff]
                %1472 = vst [vmem:[%s1422 + $0x180] sm:$0xff] %v1471
                %v1473 = vld [vmem:[%s1421 + $0xc8] sm:$0xff]
                %1474 = vst [vmem:[%s1422 + $0x190] sm:$0xff] %v1473
                %v1475 = vld [vmem:[%s1421 + $0xd0] sm:$0xff]
                %1476 = vst [vmem:[%s1422 + $0x1a0] sm:$0xff] %v1475
                %v1477 = vld [vmem:[%s1421 + $0xd8] sm:$0xff]
                %1478 = vst [vmem:[%s1422 + $0x1b0] sm:$0xff] %v1477
                %v1479 = vld [vmem:[%s1421 + $0xe0] sm:$0xff]
                %1480 = vst [vmem:[%s1422 + $0x1c0] sm:$0xff] %v1479
                %v1481 = vld [vmem:[%s1421 + $0xe8] sm:$0xff]
                %1482 = vst [vmem:[%s1422 + $0x1d0] sm:$0xff] %v1481
                %v1483 = vld [vmem:[%s1421 + $0xf0] sm:$0xff]
                %1484 = vst [vmem:[%s1422 + $0x1e0] sm:$0xff] %v1483
                %v1485 = vld [vmem:[%s1421 + $0xf8] sm:$0xff]
                %1486 = vst [vmem:[%s1422 + $0x1f0] sm:$0xff] %v1485
                %v1487 = vld [vmem:[%s1421 + $0x100] sm:$0xff]
                %1488 = vst [vmem:[%s1422 + $0x200] sm:$0xff] %v1487
                %v1489 = vld [vmem:[%s1421 + $0x108] sm:$0xff]
                %1490 = vst [vmem:[%s1422 + $0x210] sm:$0xff] %v1489
                %v1491 = vld [vmem:[%s1421 + $0x110] sm:$0xff]
                %1492 = vst [vmem:[%s1422 + $0x220] sm:$0xff] %v1491
                %v1493 = vld [vmem:[%s1421 + $0x118] sm:$0xff]
                %1494 = vst [vmem:[%s1422 + $0x230] sm:$0xff] %v1493
                %v1495 = vld [vmem:[%s1421 + $0x120] sm:$0xff]
                %1496 = vst [vmem:[%s1422 + $0x240] sm:$0xff] %v1495
                %v1497 = vld [vmem:[%s1421 + $0x128] sm:$0xff]
                %1498 = vst [vmem:[%s1422 + $0x250] sm:$0xff] %v1497
                %v1499 = vld [vmem:[%s1421 + $0x130] sm:$0xff]
                %1500 = vst [vmem:[%s1422 + $0x260] sm:$0xff] %v1499
                %v1501 = vld [vmem:[%s1421 + $0x138] sm:$0xff]
                %1502 = vst [vmem:[%s1422 + $0x270] sm:$0xff] %v1501
              $region141: #{sn_bool_vae_forward.1} parent=135 // loop_footer
                %s1420 = sadd.s32 1, %s1416
              $region142: #{sn_bool_vae_forward.1} parent=135 // loop_footer_branch
                %1415 = sbr.rel target = $region138
              $region143: #{sn_bool_vae_forward.1} parent=135 // loop_exit
                _
            $region136: #{sn_bool_vae_forward.1} parent=127 // pred_fallthru
              _
          $region128: #{sn_bool_vae_forward.1} parent=123 // pred_fallthru
            _
          %1595 = vnop
        $region124: #{sn_bool_vae_forward.1} parent=111 // pred_fallthru
          _
      $region112: #{sn_bool_vae_forward.1} parent=5 // pred_fallthru
        _
      %p1596 = scmp.le.s32.totalorder 2, %s12
      // Predicated region
      $region159: #{sn_bool_vae_forward.1} parent=5 // pred_check
        %p1597 = pneg %p1596
      $region160: #{sn_bool_vae_forward.1} parent=5 // pred_check_branch
        %1599 = sbr.rel (%p1597) target = $region162
      $region161: #{sn_bool_vae_forward.1} parent=5 // pred_region
        %s1600 = ssub.s32 %s12, 2
        // Predicated region
        $region163: #{sn_bool_vae_forward.1} parent=161 // pred_check
          %p1601 = pneg %p177
        $region164: #{sn_bool_vae_forward.1} parent=161 // pred_check_branch
          %1603 = sbr.rel (%p1601) target = $region166
        $region165: #{sn_bool_vae_forward.1} parent=161 // pred_region
          %s1604 = sand.u32 %s162, 1
          %s1605 = sand.u32 %s162, 1
          %s1606 = smul.addr %s1605, 320
          %s1607 = scalar_lea.vmem [#allocation4], %s1606
        $region166: #{sn_bool_vae_forward.1} parent=161 // pred_fallthru
          _
      $region162: #{sn_bool_vae_forward.1} parent=5 // pred_fallthru
        _
    $region6: #{sn_bool_vae_forward.1} parent=1 // loop_footer
      %s16 = sadd.s32 1, %s12
    $region7: #{sn_bool_vae_forward.1} parent=1 // loop_footer_branch
      %11 = sbr.rel target = $region3
    $region8: #{sn_bool_vae_forward.1} parent=1 // loop_exit
      _

</llo_original>
